<compile_context>
chip_gen: v6e
topology: v6e:2x2x1
jax: 0.10.0
libtpu: 0.0.40
codegen_flags: <defaults>
</compile_context>

<pallas_src>
import functools
import math

import jax
import jax.numpy as jnp
from jax import lax
from jax.experimental import pallas as pl
from jax.experimental.pallas import tpu as pltpu

N_FREQUENCIES = 10
N_SPACE = 3
OUT_DIM = 2 * N_FREQUENCIES * N_SPACE  # 60

_LANES = 128  # samples per packed group (lane width of one vreg)


def _round_up(a, b):
    return ((a + b - 1) // b) * b


def _sinusoids_kernel(xt_ref, out_ref, *, n_freq, n_space, f_pad, groups, chunk):
    """Lane-dense sinusoid embedding.

    xt_ref : (n_space, tn) f32  -- x transposed; samples on the 128-lane axis.
    out_ref: (tn, 2*n_space*n_freq) f32
    """
    nsf = n_space * n_freq
    tn = out_ref.shape[0]

    # Per-axis frequency rows, built ONCE per grid step from a tiny iota:
    # row p of F_s holds 2*pi*(p - s*n_freq) inside [s*n_freq, (s+1)*n_freq)
    # and 0 elsewhere, so ang = sum_s x_s * F_s is exact f32.
    row = lax.broadcasted_iota(jnp.int32, (f_pad, _LANES), 0)
    two_pi_f = (2.0 * math.pi) * (row % n_freq).astype(jnp.float32)
    freq_rows = [
        jnp.where((row >= s * n_freq) & (row < (s + 1) * n_freq), two_pi_f, 0.0)
        for s in range(n_space)
    ]

    def do_chunk(c, carry):
        base = pl.multiple_of(c * chunk, chunk)
        pieces = []
        for g in range(groups):                                # static, tiny
            col = pl.multiple_of(base + g * _LANES, _LANES)
            xg = xt_ref[:, pl.ds(col, _LANES)]                 # (n_space, 128)
            ang = freq_rows[0] * xg[0:1, :]
            for s in range(1, n_space):
                ang = ang + freq_rows[s] * xg[s:s + 1, :]
            pieces.append(jnp.sin(ang))                        # (f_pad, 128)
            pieces.append(jnp.cos(ang))                        # (f_pad, 128)

        # (128, 128): [sin_0 | cos_0 | sin_1 | cos_1 | ...] stacked on
        # 32-row-aligned sublane offsets, then one aligned transpose puts the
        # samples back on the sublane axis and features on the lane axis.
        stacked = jnp.concatenate(pieces, axis=0)              # (128, 128)
        t = stacked.T                                          # (128, 128) XLU

        for g in range(groups):
            c0 = g * 2 * f_pad
            feat = jnp.concatenate(
                [t[:, c0:c0 + nsf],                            # sin half
                 t[:, c0 + f_pad:c0 + f_pad + nsf]],           # cos half
                axis=1)                                        # (128, 2*nsf)
            rows = pl.multiple_of(base + g * _LANES, _LANES)
            out_ref[pl.ds(rows, _LANES), :] = feat
        return carry

    lax.fori_loop(0, tn // chunk, do_chunk, 0)


def sinusoids_embedding(x, *, n_frequencies=N_FREQUENCIES, n_space=N_SPACE,
                        tile_n=8192):
    """x: (N, n_space) float -> (N, 2*n_frequencies*n_space) float32."""
    n, ns = x.shape
    assert ns == n_space
    nsf = n_frequencies * n_space
    assert nsf <= 64, "kernel packs 2*f_pad*groups == 128 sublanes"
    out_dim = 2 * nsf

    # f_pad in {8,16,32,64}: angle rows per spatial-axis group, padded so that
    # `groups` (sin+cos) groups stack to exactly 128 sublanes.
    f_pad = max(8, pl.next_power_of_2(nsf))
    groups = 64 // f_pad
    chunk = groups * _LANES            # samples handled per inner iteration

    x = x.astype(jnp.float32)
    xt = x.T                           # (n_space, N): tiny (12*N bytes) pass

    # Large blocks amortize the per-grid-step overhead; cap at ceil(N/2) rows
    # so large-N runs keep >= 2 "parallel" grid steps (both v7x TensorCores).
    if n <= chunk:
        tn = chunk
    else:
        tn = min(_round_up(tile_n, chunk), _round_up(pl.cdiv(n, 2), chunk))
    grid = (pl.cdiv(n, tn),)

    kernel = functools.partial(
        _sinusoids_kernel, n_freq=n_frequencies, n_space=n_space,
        f_pad=f_pad, groups=groups, chunk=chunk)

    # No padding / slicing: ragged edge blocks are clipped by Pallas on
    # writeback (stale tail lanes only ever feed discarded sin/cos values).
    return pl.pallas_call(
        kernel,
        out_shape=jax.ShapeDtypeStruct((n, out_dim), jnp.float32),
        grid=grid,
        in_specs=[pl.BlockSpec((n_space, tn), lambda i: (0, i))],
        out_specs=pl.BlockSpec((tn, out_dim), lambda i: (i, 0)),
        compiler_params=pltpu.CompilerParams(
            dimension_semantics=("parallel",)),
    )(xt)


def _reference(x, n_frequencies=N_FREQUENCIES, n_space=N_SPACE):
    freq = 2.0 * math.pi * jnp.arange(n_frequencies, dtype=jnp.float32)
    emb = x[..., None] * freq[None, None, :]
    emb = emb.reshape(-1, n_frequencies * n_space)
    return jnp.concatenate((jnp.sin(emb), jnp.cos(emb)), axis=-1)


if __name__ == "__main__":
    key = jax.random.PRNGKey(0)
    k1, k2 = jax.random.split(key)

    # Small shape consistent with the module: N=16 "atoms" x 3 spatial coords.
    x_small = jax.random.normal(k1, (16, N_SPACE), dtype=jnp.float32)
    out_small = jax.block_until_ready(sinusoids_embedding(x_small))
    assert out_small.shape == (16, OUT_DIM)
    assert jnp.allclose(out_small, _reference(x_small), atol=1e-5, rtol=1e-5)

    # Larger, non-tile-multiple N (fractional-coordinate-like inputs) to
    # exercise the multi-step grid, the inner chunk loop and the ragged edge.
    x_big = jax.random.uniform(k2, (3000, N_SPACE), dtype=jnp.float32)
    out_big = jax.block_until_ready(sinusoids_embedding(x_big))
    assert out_big.shape == (3000, OUT_DIM)
    assert jnp.allclose(out_big, _reference(x_big), atol=1e-5, rtol=1e-5)

    print("KERNEL_OK")
</pallas_src>

<mosaic_0001>
module attributes {stable_mosaic.version = 11 : i64} {
  func.func @_sinusoids_kernel(%arg0: i32, %arg1: memref<3x256xf32, #tpu.memory_space<vmem>>, %arg2: memref<256x60xf32, #tpu.memory_space<vmem>>) attributes {dimension_semantics = [#tpu.dimension_semantics<parallel>], iteration_bounds = array<i64: 1>, scalar_prefetch = 0 : i64, scratch_operands = 0 : i64, tpu.core_type = #tpu.core_type<tc>, window_params = [{transform_indices = @transform_0, window_bounds = array<i64: 3, 256>}, {transform_indices = @transform_1, window_bounds = array<i64: 256, 60>}]} {
    %0 = tpu.iota {dimensions = array<i32: 0>} : vector<32x128xi32>
    %c10_i32 = arith.constant 10 : i32
    %c0_i32 = arith.constant 0 : i32
    %1 = arith.cmpi eq, %c10_i32, %c0_i32 : i32
    %c1_i32 = arith.constant 1 : i32
    %2 = arith.select %1, %c1_i32, %c10_i32 : i32
    %3 = vector.broadcast %2 : i32 to vector<32x128xi32>
    %4 = arith.remsi %0, %3 : vector<32x128xi32>
    %c0_i32_0 = arith.constant 0 : i32
    %5 = vector.broadcast %c0_i32_0 : i32 to vector<32x128xi32>
    %6 = arith.cmpi ne, %4, %5 : vector<32x128xi32>
    %c0_i32_1 = arith.constant 0 : i32
    %7 = vector.broadcast %c0_i32_1 : i32 to vector<32x128xi32>
    %8 = arith.cmpi slt, %4, %7 : vector<32x128xi32>
    %c0_i32_2 = arith.constant 0 : i32
    %9 = arith.cmpi slt, %2, %c0_i32_2 : i32
    %10 = vector.broadcast %9 : i1 to vector<32x128xi1>
    %11 = vector.broadcast %10 : vector<32x128xi1> to vector<32x128xi1>
    %12 = arith.xori %8, %11 : vector<32x128xi1>
    %13 = arith.andi %12, %6 : vector<32x128xi1>
    %14 = vector.broadcast %2 : i32 to vector<32x128xi32>
    %15 = arith.addi %4, %14 : vector<32x128xi32>
    %16 = arith.select %13, %15, %4 : vector<32x128xi1>, vector<32x128xi32>
    %17 = arith.sitofp %16 : vector<32x128xi32> to vector<32x128xf32>
    %cst = arith.constant 6.28318548 : f32
    %18 = vector.broadcast %cst : f32 to vector<32x128xf32>
    %19 = arith.mulf %18, %17 : vector<32x128xf32>
    %c0_i32_3 = arith.constant 0 : i32
    %20 = vector.broadcast %c0_i32_3 : i32 to vector<32x128xi32>
    %21 = arith.cmpi sge, %0, %20 : vector<32x128xi32>
    %c10_i32_4 = arith.constant 10 : i32
    %22 = vector.broadcast %c10_i32_4 : i32 to vector<32x128xi32>
    %23 = arith.cmpi slt, %0, %22 : vector<32x128xi32>
    %24 = arith.andi %21, %23 : vector<32x128xi1>
    %cst_5 = arith.constant 0.000000e+00 : f32
    %25 = vector.broadcast %cst_5 : f32 to vector<32x128xf32>
    %26 = arith.select %24, %19, %25 : vector<32x128xi1>, vector<32x128xf32>
    %c10_i32_6 = arith.constant 10 : i32
    %27 = vector.broadcast %c10_i32_6 : i32 to vector<32x128xi32>
    %28 = arith.cmpi sge, %0, %27 : vector<32x128xi32>
    %c20_i32 = arith.constant 20 : i32
    %29 = vector.broadcast %c20_i32 : i32 to vector<32x128xi32>
    %30 = arith.cmpi slt, %0, %29 : vector<32x128xi32>
    %31 = arith.andi %28, %30 : vector<32x128xi1>
    %cst_7 = arith.constant 0.000000e+00 : f32
    %32 = vector.broadcast %cst_7 : f32 to vector<32x128xf32>
    %33 = arith.select %31, %19, %32 : vector<32x128xi1>, vector<32x128xf32>
    %c20_i32_8 = arith.constant 20 : i32
    %34 = vector.broadcast %c20_i32_8 : i32 to vector<32x128xi32>
    %35 = arith.cmpi sge, %0, %34 : vector<32x128xi32>
    %c30_i32 = arith.constant 30 : i32
    %36 = vector.broadcast %c30_i32 : i32 to vector<32x128xi32>
    %37 = arith.cmpi slt, %0, %36 : vector<32x128xi32>
    %38 = arith.andi %35, %37 : vector<32x128xi1>
    %cst_9 = arith.constant 0.000000e+00 : f32
    %39 = vector.broadcast %cst_9 : f32 to vector<32x128xf32>
    %40 = arith.select %38, %19, %39 : vector<32x128xi1>, vector<32x128xf32>
    %c0_i32_10 = arith.constant 0 : i32
    %c256_i32 = arith.constant 256 : i32
    %41 = arith.muli %c0_i32_10, %c256_i32 : i32
    %42 = tpu.assume_multiple %41, 256 : i32
    %c0_i32_11 = arith.constant 0 : i32
    %43 = arith.addi %42, %c0_i32_11 : i32
    %44 = tpu.assume_multiple %43, 128 : i32
    %c0 = arith.constant 0 : index
    %45 = arith.index_cast %44 : i32 to index
    %46 = vector.load %arg1[%c0, %45] : memref<3x256xf32, #tpu.memory_space<vmem>>, vector<3x128xf32>
    %47 = vector.extract_strided_slice %46 {offsets = [0, 0], sizes = [1, 128], strides = [1, 1]} : vector<3x128xf32> to vector<1x128xf32>
    %48 = vector.broadcast %47 : vector<1x128xf32> to vector<32x128xf32>
    %49 = arith.mulf %26, %48 : vector<32x128xf32>
    %50 = vector.extract_strided_slice %46 {offsets = [1, 0], sizes = [1, 128], strides = [1, 1]} : vector<3x128xf32> to vector<1x128xf32>
    %51 = vector.broadcast %50 : vector<1x128xf32> to vector<32x128xf32>
    %52 = arith.mulf %33, %51 : vector<32x128xf32>
    %53 = arith.addf %49, %52 : vector<32x128xf32>
    %54 = vector.extract_strided_slice %46 {offsets = [2, 0], sizes = [1, 128], strides = [1, 1]} : vector<3x128xf32> to vector<1x128xf32>
    %55 = vector.broadcast %54 : vector<1x128xf32> to vector<32x128xf32>
    %56 = arith.mulf %40, %55 : vector<32x128xf32>
    %57 = arith.addf %53, %56 : vector<32x128xf32>
    %58 = math.sin %57 : vector<32x128xf32>
    %59 = math.cos %57 : vector<32x128xf32>
    %c128_i32 = arith.constant 128 : i32
    %60 = arith.addi %42, %c128_i32 : i32
    %61 = tpu.assume_multiple %60, 128 : i32
    %c0_12 = arith.constant 0 : index
    %62 = arith.index_cast %61 : i32 to index
    %63 = vector.load %arg1[%c0_12, %62] : memref<3x256xf32, #tpu.memory_space<vmem>>, vector<3x128xf32>
    %64 = vector.extract_strided_slice %63 {offsets = [0, 0], sizes = [1, 128], strides = [1, 1]} : vector<3x128xf32> to vector<1x128xf32>
    %65 = vector.broadcast %64 : vector<1x128xf32> to vector<32x128xf32>
    %66 = arith.mulf %26, %65 : vector<32x128xf32>
    %67 = vector.extract_strided_slice %63 {offsets = [1, 0], sizes = [1, 128], strides = [1, 1]} : vector<3x128xf32> to vector<1x128xf32>
    %68 = vector.broadcast %67 : vector<1x128xf32> to vector<32x128xf32>
    %69 = arith.mulf %33, %68 : vector<32x128xf32>
    %70 = arith.addf %66, %69 : vector<32x128xf32>
    %71 = vector.extract_strided_slice %63 {offsets = [2, 0], sizes = [1, 128], strides = [1, 1]} : vector<3x128xf32> to vector<1x128xf32>
    %72 = vector.broadcast %71 : vector<1x128xf32> to vector<32x128xf32>
    %73 = arith.mulf %40, %72 : vector<32x128xf32>
    %74 = arith.addf %70, %73 : vector<32x128xf32>
    %75 = math.sin %74 : vector<32x128xf32>
    %76 = math.cos %74 : vector<32x128xf32>
    %77 = tpu.concatenate %58, %59, %75, %76 in 0 : vector<32x128xf32>, vector<32x128xf32>, vector<32x128xf32>, vector<32x128xf32> -> vector<128x128xf32>
    %78 = tpu.transpose %77, [1, 0] : vector<128x128xf32> -> vector<128x128xf32>
    %79 = vector.extract_strided_slice %78 {offsets = [0, 0], sizes = [128, 30], strides = [1, 1]} : vector<128x128xf32> to vector<128x30xf32>
    %80 = vector.extract_strided_slice %78 {offsets = [0, 32], sizes = [128, 30], strides = [1, 1]} : vector<128x128xf32> to vector<128x30xf32>
    %81 = tpu.concatenate %79, %80 in 1 : vector<128x30xf32>, vector<128x30xf32> -> vector<128x60xf32>
    %c0_i32_13 = arith.constant 0 : i32
    %82 = arith.addi %42, %c0_i32_13 : i32
    %83 = tpu.assume_multiple %82, 128 : i32
    %84 = arith.index_cast %83 : i32 to index
    %c0_14 = arith.constant 0 : index
    %85 = vector.load %arg2[%84, %c0_14] : memref<256x60xf32, #tpu.memory_space<vmem>>, vector<128x60xf32>
    tpu.vector_store %arg2[%84, %c0_14], %81 {strides = array<i32>} : memref<256x60xf32, #tpu.memory_space<vmem>>, vector<128x60xf32>,
    %86 = vector.extract_strided_slice %78 {offsets = [0, 64], sizes = [128, 30], strides = [1, 1]} : vector<128x128xf32> to vector<128x30xf32>
    %87 = vector.extract_strided_slice %78 {offsets = [0, 96], sizes = [128, 30], strides = [1, 1]} : vector<128x128xf32> to vector<128x30xf32>
    %88 = tpu.concatenate %86, %87 in 1 : vector<128x30xf32>, vector<128x30xf32> -> vector<128x60xf32>
    %c128_i32_15 = arith.constant 128 : i32
    %89 = arith.addi %42, %c128_i32_15 : i32
    %90 = tpu.assume_multiple %89, 128 : i32
    %91 = arith.index_cast %90 : i32 to index
    %c0_16 = arith.constant 0 : index
    %92 = vector.load %arg2[%91, %c0_16] : memref<256x60xf32, #tpu.memory_space<vmem>>, vector<128x60xf32>
    tpu.vector_store %arg2[%91, %c0_16], %88 {strides = array<i32>} : memref<256x60xf32, #tpu.memory_space<vmem>>, vector<128x60xf32>,
    %c1_i32_17 = arith.constant 1 : i32
    return
  }
  func.func @transform_0(%arg0: i32) -> (i32, i32) {
    %c0_i32 = arith.constant 0 : i32
    %c0_i32_0 = arith.constant 0 : i32
    return %c0_i32, %arg0 : i32, i32
  }
  func.func @transform_1(%arg0: i32) -> (i32, i32) {
    %c0_i32 = arith.constant 0 : i32
    %c0_i32_0 = arith.constant 0 : i32
    return %arg0, %c0_i32 : i32, i32
  }
}

</mosaic_0001>

<llo_original>
// kernel: tpu_custom_call.1
$region0: #{tpu_custom_call.1}
  #allocation0 [shape = 'u32[]', space=smem, size = 0x4, offset = 0x4, fixed_abs, tag = 'smem constant byte address 0x4 - core index']
  #allocation1 [shape = 'u32[144,128]{1,0:T(1,128)}', space=vmem, size = 0x12000, scoped, tag = 'internal scratch']
  %s0 = inlined_call_operand.hbm [shape: f32[3,16], index: 0, kind: input, shape index: {}]
  %s1 = inlined_call_operand.hbm [shape: f32[16,60], index: 1, kind: output, shape index: {}]
  %s2 = sld [smem:[#allocation0]]
  $region18: #{tpu_custom_call.1} parent=0
    _
  %s4 = ssub.s32 1, %s2
  %s5 = scalar_select 0, %s4, %s2
  $region1: #{tpu_custom_call.1} parent=0
    #allocation2 [shape = 'u8[4096]{0}', space=vmem, size = 0x1000, scoped, tag = 'input window, operand 0, single buffered']
    #allocation3 [shape = 's32[1]{0}', space=sflag, size = 0x4, scoped, tag = 'scoped memory for tpu_custom_call.1']
    #allocation4 [shape = 's32[1]{0}', space=sflag, size = 0x4, scoped, tag = 'scoped memory for tpu_custom_call.1']
    #allocation5 [shape = 'u8[131072]{0}', space=vmem, size = 0x20000, scoped, tag = 'output window, operand 0, single buffered']
    %6 = vsyncpa [#allocation3], 0
    %7 = vsyncpa [#allocation4], 0
    // Predicated region
    $region2: #{tpu_custom_call.1} parent=1 // pred_check
      _
    $region3: #{tpu_custom_call.1} parent=1 // pred_check_branch
      %9 = sbr.rel (0) target = $region5
    $region4: #{tpu_custom_call.1} parent=1 // pred_region
      %s11 = ssub.s32 128, 64
      %12 = vsyncadd [#allocation3], %s11
      %s14 = sshll.u32 [#allocation2], 4
      %s15 = int_to_ptr.vmem [resolvable:$true] %s14
      %17 = dma.hbm_to_vmem [thread:$0]  %s0, 64, %s15, [#allocation3]
    $region5: #{tpu_custom_call.1} parent=1 // pred_fallthru
      _
    // Predicated region
    $region6: #{tpu_custom_call.1} parent=1 // pred_check
      _
    $region7: #{tpu_custom_call.1} parent=1 // pred_check_branch
      %19 = sbr.rel (0) target = $region9
    $region8: #{tpu_custom_call.1} parent=1 // pred_region
      %20 = dma.done [#allocation3], 128
    $region9: #{tpu_custom_call.1} parent=1 // pred_fallthru
      _
    %v21 = vlaneseq
    %v22 = vshrl.u32 %v21, 7
    %v23 = vadd.s32 %v22, 8
    %v24 = vadd.s32 %v22, 16
    %v25 = vadd.s32 %v22, 24
    %vm26 = vcmp.lt.s32.totalorder %v22, 0
    %v27 = vsub.s32 0, %v22
    %v28 = vsel %vm26, %v27, %v22
    %v29 = vmul.u32.u64.compose %v28, 3435973837
    %v30 = vextract.low.u32 %v29
    %v31 = vextract.high.u32 %v29
    %v32 = vshrl.u32 %v31, 3
    %v33 = vmul.u32 %v32, 10
    %v34 = vsub.s32 %v28, %v33
    %v35 = vsub.s32 0, %v34
    %v36 = vsel %vm26, %v35, %v34
    %vm37 = vcmp.lt.s32.totalorder %v23, 0
    %v38 = vsub.s32 0, %v23
    %v39 = vsel %vm37, %v38, %v23
    %v40 = vmul.u32.u64.compose %v39, 3435973837
    %v41 = vextract.low.u32 %v40
    %v42 = vextract.high.u32 %v40
    %v43 = vshrl.u32 %v42, 3
    %v44 = vmul.u32 %v43, 10
    %v45 = vsub.s32 %v39, %v44
    %v46 = vsub.s32 0, %v45
    %v47 = vsel %vm37, %v46, %v45
    %vm48 = vcmp.lt.s32.totalorder %v24, 0
    %v49 = vsub.s32 0, %v24
    %v50 = vsel %vm48, %v49, %v24
    %v51 = vmul.u32.u64.compose %v50, 3435973837
    %v52 = vextract.low.u32 %v51
    %v53 = vextract.high.u32 %v51
    %v54 = vshrl.u32 %v53, 3
    %v55 = vmul.u32 %v54, 10
    %v56 = vsub.s32 %v50, %v55
    %v57 = vsub.s32 0, %v56
    %v58 = vsel %vm48, %v57, %v56
    %vm59 = vcmp.lt.s32.totalorder %v25, 0
    %v60 = vsub.s32 0, %v25
    %v61 = vsel %vm59, %v60, %v25
    %v62 = vmul.u32.u64.compose %v61, 3435973837
    %v63 = vextract.low.u32 %v62
    %v64 = vextract.high.u32 %v62
    %v65 = vshrl.u32 %v64, 3
    %v66 = vmul.u32 %v65, 10
    %v67 = vsub.s32 %v61, %v66
    %v68 = vsub.s32 0, %v67
    %v69 = vsel %vm59, %v68, %v67
    %vm70 = vcmp.ne.s32.totalorder %v36, 0
    %vm71 = vcmp.ne.s32.totalorder %v47, 0
    %vm72 = vcmp.ne.s32.totalorder %v58, 0
    %vm73 = vcmp.ne.s32.totalorder %v69, 0
    %vm74 = vcmp.lt.s32.totalorder %v36, 0
    %vm75 = vcmp.lt.s32.totalorder %v47, 0
    %vm76 = vcmp.lt.s32.totalorder %v58, 0
    %vm77 = vcmp.lt.s32.totalorder %v69, 0
    %vm78 = vmand %vm74, %vm70
    %vm79 = vmand %vm75, %vm71
    %vm80 = vmand %vm76, %vm72
    %vm81 = vmand %vm77, %vm73
    %v82 = vadd.s32 %v36, 10
    %v83 = vadd.s32 %v47, 10
    %v84 = vadd.s32 %v58, 10
    %v85 = vadd.s32 %v69, 10
    %v86 = vsel %vm78, %v82, %v36
    %v87 = vsel %vm79, %v83, %v47
    %v88 = vsel %vm80, %v84, %v58
    %v89 = vsel %vm81, %v85, %v69
    %v90 = vcvt.s32.f32 %v86
    %v91 = vcvt.s32.f32 %v87
    %v92 = vcvt.s32.f32 %v88
    %v93 = vcvt.s32.f32 %v89
    %v94 = vmul.f32 %v90, 6.2831855
    %v95 = vmul.f32 %v91, 6.2831855
    %v96 = vmul.f32 %v92, 6.2831855
    %v97 = vmul.f32 %v93, 6.2831855
    %vm98 = vcmp.ge.s32.totalorder %v22, 0
    %vm99 = vcmp.ge.s32.totalorder %v23, 0
    %vm100 = vcmp.ge.s32.totalorder %v24, 0
    %vm101 = vcmp.ge.s32.totalorder %v25, 0
    %vm102 = vcmp.lt.s32.totalorder %v22, 10
    %vm103 = vcmp.lt.s32.totalorder %v23, 10
    %vm104 = vcmp.lt.s32.totalorder %v24, 10
    %vm105 = vcmp.lt.s32.totalorder %v25, 10
    %vm106 = vmand %vm98, %vm102
    %vm107 = vmand %vm99, %vm103
    %vm108 = vmand %vm100, %vm104
    %vm109 = vmand %vm101, %vm105
    %v110 = vsel %vm106, %v94, 0.0
    %v111 = vsel %vm107, %v95, 0.0
    %v112 = vsel %vm108, %v96, 0.0
    %v113 = vsel %vm109, %v97, 0.0
    %vm114 = vcmp.ge.s32.totalorder %v22, 10
    %vm115 = vcmp.ge.s32.totalorder %v23, 10
    %vm116 = vcmp.ge.s32.totalorder %v24, 10
    %vm117 = vcmp.ge.s32.totalorder %v25, 10
    %vm118 = vcmp.lt.s32.totalorder %v22, 20
    %vm119 = vcmp.lt.s32.totalorder %v23, 20
    %vm120 = vcmp.lt.s32.totalorder %v24, 20
    %vm121 = vcmp.lt.s32.totalorder %v25, 20
    %vm122 = vmand %vm114, %vm118
    %vm123 = vmand %vm115, %vm119
    %vm124 = vmand %vm116, %vm120
    %vm125 = vmand %vm117, %vm121
    %v126 = vsel %vm122, %v94, 0.0
    %v127 = vsel %vm123, %v95, 0.0
    %v128 = vsel %vm124, %v96, 0.0
    %v129 = vsel %vm125, %v97, 0.0
    %vm130 = vcmp.ge.s32.totalorder %v22, 20
    %vm131 = vcmp.ge.s32.totalorder %v23, 20
    %vm132 = vcmp.ge.s32.totalorder %v24, 20
    %vm133 = vcmp.ge.s32.totalorder %v25, 20
    %vm134 = vcmp.lt.s32.totalorder %v22, 30
    %vm135 = vcmp.lt.s32.totalorder %v23, 30
    %vm136 = vcmp.lt.s32.totalorder %v24, 30
    %vm137 = vcmp.lt.s32.totalorder %v25, 30
    %vm138 = vmand %vm130, %vm134
    %vm139 = vmand %vm131, %vm135
    %vm140 = vmand %vm132, %vm136
    %vm141 = vmand %vm133, %vm137
    %v142 = vsel %vm138, %v94, 0.0
    %v143 = vsel %vm139, %v95, 0.0
    %v144 = vsel %vm140, %v96, 0.0
    %v145 = vsel %vm141, %v97, 0.0
    %v146 = vld [vmem:[#allocation2] sm:$0x7]
    %v147 = vlaneseq
    %v148 = vshrl.u32 %v147, 7
    %v149 = vsub.s32 0, %v148
    %v150 = vrot.slane %v146, %v149
    %v151 = vmul.f32 %v110, %v150
    %v152 = vmul.f32 %v111, %v150
    %v153 = vmul.f32 %v112, %v150
    %v154 = vmul.f32 %v113, %v150
    %v155 = vlaneseq
    %v156 = vshrl.u32 %v155, 7
    %v157 = vsub.s32 1, %v156
    %v158 = vrot.slane %v146, %v157
    %v159 = vmul.f32 %v126, %v158
    %v160 = vmul.f32 %v127, %v158
    %v161 = vmul.f32 %v128, %v158
    %v162 = vmul.f32 %v129, %v158
    %v163 = vadd.f32 %v151, %v159
    %v164 = vadd.f32 %v152, %v160
    %v165 = vadd.f32 %v153, %v161
    %v166 = vadd.f32 %v154, %v162
    %v167 = vlaneseq
    %v168 = vshrl.u32 %v167, 7
    %v169 = vsub.s32 2, %v168
    %v170 = vrot.slane %v146, %v169
    %v171 = vmul.f32 %v142, %v170
    %v172 = vmul.f32 %v143, %v170
    %v173 = vmul.f32 %v144, %v170
    %v174 = vmul.f32 %v145, %v170
    %v175 = vadd.f32 %v163, %v171
    %v176 = vadd.f32 %v164, %v172
    %v177 = vadd.f32 %v165, %v173
    %v178 = vadd.f32 %v166, %v174
    %v179 = vand.u32 2147483647, %v175
    %vm180 = vcmp.le.f32.partialorder %v179, 0.7853982
    %vm181 = vcmp.lt.s32.totalorder %v175, 0
    %v182 = vand.u32 %v175, 2139095040
    %v183 = vshrl.u32 %v182, 23
    %v184 = vsub.s32 %v183, 127
    %v185 = vand.u32 2147483647, %v175
    %v186 = vand.u32 %v185, 8388607
    %v187 = vor.u32 %v186, 8388608
    %v188 = vsub.s32 0, %v187
    %v189 = vadd.s32 %v184, 1
    %vm190 = vcmp.gt.s32.totalorder %v189, 0
    %v191 = vsel %vm190, %v189, 0
    %v192 = vshrl.u32 %v191, 5
    %v193 = vand.u32 %v191, 31
    %v194 = vsub.s32 32, %v193
    %v195 = vshrl.u32 683565275, %v194
    %v196 = vshll.u32 683565275, %v193
    %v197 = vshrl.u32 2475754826, %v194
    %v198 = vor.u32 %v196, %v197
    %v199 = vshll.u32 2475754826, %v193
    %v200 = vshrl.u32 2131351028, %v194
    %v201 = vor.u32 %v199, %v200
    %v202 = vshll.u32 2131351028, %v193
    %v203 = vshrl.u32 2102212464, %v194
    %v204 = vor.u32 %v202, %v203
    %v205 = vshll.u32 2102212464, %v193
    %v206 = vshrl.u32 920167782, %v194
    %v207 = vor.u32 %v205, %v206
    %v208 = vshll.u32 920167782, %v193
    %v209 = vshrl.u32 1326507024, %v194
    %v210 = vor.u32 %v208, %v209
    %vm211 = vcmp.lt.s32.totalorder %v192, 1
    %vm212 = vcmp.lt.s32.totalorder %v192, 2
    %vm213 = vcmp.lt.s32.totalorder %v192, 3
    %vm214 = vcmp.lt.s32.totalorder %v192, 4
    %v215 = vsel %vm211, %v195, %v198
    %v216 = vsel %vm214, %v204, 2102212464
    %v217 = vsel %vm213, %v201, %v216
    %v218 = vsel %vm212, %v215, %v217
    %v219 = vsel %vm211, %v198, %v201
    %v220 = vsel %vm214, %v207, 920167782
    %v221 = vsel %vm213, %v204, %v220
    %v222 = vsel %vm212, %v219, %v221
    %v223 = vsel %vm211, %v201, %v204
    %v224 = vsel %vm214, %v210, 1326507024
    %v225 = vsel %vm213, %v207, %v224
    %v226 = vsel %vm212, %v223, %v225
    %v227 = vshll.u32 %v187, 8
    %v228 = vmul.u32.u64.compose %v227, %v226
    %v229 = vextract.low.u32 %v228
    %v230 = vextract.high.u32 %v228
    %v231 = vmul.u32.u64.compose %v227, %v222
    %v232 = vextract.low.u32 %v231
    %v233 = vextract.high.u32 %v231
    %v234 = vmul.u32 %v227, %v218
    %v235 = vadd.s32 %v230, %v232
    %vm236 = vc.u32 %v230, %v232
    %v237 = vadd.s32 %v233, 1
    %v238 = vsel %vm236, %v237, %v233
    %v239 = vadd.s32 %v234, %v238
    %v240 = vadd.s32 %v239, 536870912
    %v241 = vshrl.u32 %v240, 30
    %v242 = vshll.u32 %v241, 30
    %v243 = vsub.s32 %v239, %v242
    %vm244 = vcmp.lt.s32.totalorder %v243, 0
    %v245 = vsub.s32 0, %v243
    %v246 = vsel %vm244, %v245, %v243
    %v247 = vclz %v246
    %v248 = vsub.s32 %v247, 2
    %vm249 = vcmp.gt.s32.totalorder 0, %v248
    %v250 = vsel %vm249, 0, %v248
    %v251 = vsub.s32 32, %v250
    %v252 = vshll.u32 %v243, %v250
    %v253 = vshrl.u32 %v235, %v251
    %v254 = vor.u32 %v252, %v253
    %v255 = vsub.s32 4294967266, %v250
    %v256 = vadd.s32 %v255, 127
    %v257 = vshll.u32 %v256, 23
    %v258 = vor.u32 4788187, %v257
    %v259 = vand.u32 2147483647, %v258
    %v261 = vcvt.s32.f32 %v254
    %v262 = vmul.f32 %v261, %v259
    %v263 = vxor.u32 %v262, 2147483648
    %v264 = vsel %vm181, %v263, %v262
    %v265 = vsub.s32 4, %v241
    %v266 = vsel %vm181, %v265, %v241
    %v267 = vsel %vm180, %v175, %v264
    %v268 = vsel %vm180, 0, %v266
    %v269 = vcosq.f32.pop %v267
    %v270 = vsinq.f32.pop %v267
    %vm271 = vweird.f32 %v175
    %v272 = vadd.s32 %v268, 3
    %v273 = vand.u32 %v272, 3
    %vm274 = vcmp.lt.s32.totalorder %v273, 2
    %vm275 = vcmp.eq.s32.totalorder %v273, 0
    %v276 = vxor.u32 %v270, 2147483648
    %v277 = vsel %vm275, %v269, %v276
    %vm278 = vcmp.eq.s32.totalorder %v273, 2
    %v279 = vxor.u32 %v269, 2147483648
    %v280 = vsel %vm278, %v279, %v270
    %v281 = vsel %vm274, %v277, %v280
    %v282 = vsel %vm271, nan, %v281
    %v283 = vand.u32 2147483647, %v176
    %vm284 = vcmp.le.f32.partialorder %v283, 0.7853982
    %vm285 = vcmp.lt.s32.totalorder %v176, 0
    %v286 = vand.u32 %v176, 2139095040
    %v287 = vshrl.u32 %v286, 23
    %v288 = vsub.s32 %v287, 127
    %v289 = vand.u32 2147483647, %v176
    %v290 = vand.u32 %v289, 8388607
    %v291 = vor.u32 %v290, 8388608
    %v292 = vsub.s32 0, %v291
    %v293 = vadd.s32 %v288, 1
    %vm294 = vcmp.gt.s32.totalorder %v293, 0
    %v295 = vsel %vm294, %v293, 0
    %v296 = vshrl.u32 %v295, 5
    %v297 = vand.u32 %v295, 31
    %v298 = vsub.s32 32, %v297
    %v299 = vshrl.u32 683565275, %v298
    %v300 = vshll.u32 683565275, %v297
    %v301 = vshrl.u32 2475754826, %v298
    %v302 = vor.u32 %v300, %v301
    %v303 = vshll.u32 2475754826, %v297
    %v304 = vshrl.u32 2131351028, %v298
    %v305 = vor.u32 %v303, %v304
    %v306 = vshll.u32 2131351028, %v297
    %v307 = vshrl.u32 2102212464, %v298
    %v308 = vor.u32 %v306, %v307
    %v309 = vshll.u32 2102212464, %v297
    %v310 = vshrl.u32 920167782, %v298
    %v311 = vor.u32 %v309, %v310
    %v312 = vshll.u32 920167782, %v297
    %v313 = vshrl.u32 1326507024, %v298
    %v314 = vor.u32 %v312, %v313
    %vm315 = vcmp.lt.s32.totalorder %v296, 1
    %vm316 = vcmp.lt.s32.totalorder %v296, 2
    %vm317 = vcmp.lt.s32.totalorder %v296, 3
    %vm318 = vcmp.lt.s32.totalorder %v296, 4
    %v319 = vsel %vm315, %v299, %v302
    %v320 = vsel %vm318, %v308, 2102212464
    %v321 = vsel %vm317, %v305, %v320
    %v322 = vsel %vm316, %v319, %v321
    %v323 = vsel %vm315, %v302, %v305
    %v324 = vsel %vm318, %v311, 920167782
    %v325 = vsel %vm317, %v308, %v324
    %v326 = vsel %vm316, %v323, %v325
    %v327 = vsel %vm315, %v305, %v308
    %v328 = vsel %vm318, %v314, 1326507024
    %v329 = vsel %vm317, %v311, %v328
    %v330 = vsel %vm316, %v327, %v329
    %v331 = vshll.u32 %v291, 8
    %v332 = vmul.u32.u64.compose %v331, %v330
    %v333 = vextract.low.u32 %v332
    %v334 = vextract.high.u32 %v332
    %v335 = vmul.u32.u64.compose %v331, %v326
    %v336 = vextract.low.u32 %v335
    %v337 = vextract.high.u32 %v335
    %v338 = vmul.u32 %v331, %v322
    %v339 = vadd.s32 %v334, %v336
    %vm340 = vc.u32 %v334, %v336
    %v341 = vadd.s32 %v337, 1
    %v342 = vsel %vm340, %v341, %v337
    %v343 = vadd.s32 %v338, %v342
    %v344 = vadd.s32 %v343, 536870912
    %v345 = vshrl.u32 %v344, 30
    %v346 = vshll.u32 %v345, 30
    %v347 = vsub.s32 %v343, %v346
    %vm348 = vcmp.lt.s32.totalorder %v347, 0
    %v349 = vsub.s32 0, %v347
    %v350 = vsel %vm348, %v349, %v347
    %v351 = vclz %v350
    %v352 = vsub.s32 %v351, 2
    %vm353 = vcmp.gt.s32.totalorder 0, %v352
    %v354 = vsel %vm353, 0, %v352
    %v355 = vsub.s32 32, %v354
    %v356 = vshll.u32 %v347, %v354
    %v357 = vshrl.u32 %v339, %v355
    %v358 = vor.u32 %v356, %v357
    %v359 = vsub.s32 4294967266, %v354
    %v360 = vadd.s32 %v359, 127
    %v361 = vshll.u32 %v360, 23
    %v362 = vor.u32 4788187, %v361
    %v363 = vand.u32 2147483647, %v362
    %v365 = vcvt.s32.f32 %v358
    %v366 = vmul.f32 %v365, %v363
    %v367 = vxor.u32 %v366, 2147483648
    %v368 = vsel %vm285, %v367, %v366
    %v369 = vsub.s32 4, %v345
    %v370 = vsel %vm285, %v369, %v345
    %v371 = vsel %vm284, %v176, %v368
    %v372 = vsel %vm284, 0, %v370
    %v373 = vcosq.f32.pop %v371
    %v374 = vsinq.f32.pop %v371
    %vm375 = vweird.f32 %v176
    %v376 = vadd.s32 %v372, 3
    %v377 = vand.u32 %v376, 3
    %vm378 = vcmp.lt.s32.totalorder %v377, 2
    %vm379 = vcmp.eq.s32.totalorder %v377, 0
    %v380 = vxor.u32 %v374, 2147483648
    %v381 = vsel %vm379, %v373, %v380
    %vm382 = vcmp.eq.s32.totalorder %v377, 2
    %v383 = vxor.u32 %v373, 2147483648
    %v384 = vsel %vm382, %v383, %v374
    %v385 = vsel %vm378, %v381, %v384
    %v386 = vsel %vm375, nan, %v385
    %v387 = vand.u32 2147483647, %v177
    %vm388 = vcmp.le.f32.partialorder %v387, 0.7853982
    %vm389 = vcmp.lt.s32.totalorder %v177, 0
    %v390 = vand.u32 %v177, 2139095040
    %v391 = vshrl.u32 %v390, 23
    %v392 = vsub.s32 %v391, 127
    %v393 = vand.u32 2147483647, %v177
    %v394 = vand.u32 %v393, 8388607
    %v395 = vor.u32 %v394, 8388608
    %v396 = vsub.s32 0, %v395
    %v397 = vadd.s32 %v392, 1
    %vm398 = vcmp.gt.s32.totalorder %v397, 0
    %v399 = vsel %vm398, %v397, 0
    %v400 = vshrl.u32 %v399, 5
    %v401 = vand.u32 %v399, 31
    %v402 = vsub.s32 32, %v401
    %v403 = vshrl.u32 683565275, %v402
    %v404 = vshll.u32 683565275, %v401
    %v405 = vshrl.u32 2475754826, %v402
    %v406 = vor.u32 %v404, %v405
    %v407 = vshll.u32 2475754826, %v401
    %v408 = vshrl.u32 2131351028, %v402
    %v409 = vor.u32 %v407, %v408
    %v410 = vshll.u32 2131351028, %v401
    %v411 = vshrl.u32 2102212464, %v402
    %v412 = vor.u32 %v410, %v411
    %v413 = vshll.u32 2102212464, %v401
    %v414 = vshrl.u32 920167782, %v402
    %v415 = vor.u32 %v413, %v414
    %v416 = vshll.u32 920167782, %v401
    %v417 = vshrl.u32 1326507024, %v402
    %v418 = vor.u32 %v416, %v417
    %vm419 = vcmp.lt.s32.totalorder %v400, 1
    %vm420 = vcmp.lt.s32.totalorder %v400, 2
    %vm421 = vcmp.lt.s32.totalorder %v400, 3
    %vm422 = vcmp.lt.s32.totalorder %v400, 4
    %v423 = vsel %vm419, %v403, %v406
    %v424 = vsel %vm422, %v412, 2102212464
    %v425 = vsel %vm421, %v409, %v424
    %v426 = vsel %vm420, %v423, %v425
    %v427 = vsel %vm419, %v406, %v409
    %v428 = vsel %vm422, %v415, 920167782
    %v429 = vsel %vm421, %v412, %v428
    %v430 = vsel %vm420, %v427, %v429
    %v431 = vsel %vm419, %v409, %v412
    %v432 = vsel %vm422, %v418, 1326507024
    %v433 = vsel %vm421, %v415, %v432
    %v434 = vsel %vm420, %v431, %v433
    %v435 = vshll.u32 %v395, 8
    %v436 = vmul.u32.u64.compose %v435, %v434
    %v437 = vextract.low.u32 %v436
    %v438 = vextract.high.u32 %v436
    %v439 = vmul.u32.u64.compose %v435, %v430
    %v440 = vextract.low.u32 %v439
    %v441 = vextract.high.u32 %v439
    %v442 = vmul.u32 %v435, %v426
    %v443 = vadd.s32 %v438, %v440
    %vm444 = vc.u32 %v438, %v440
    %v445 = vadd.s32 %v441, 1
    %v446 = vsel %vm444, %v445, %v441
    %v447 = vadd.s32 %v442, %v446
    %v448 = vadd.s32 %v447, 536870912
    %v449 = vshrl.u32 %v448, 30
    %v450 = vshll.u32 %v449, 30
    %v451 = vsub.s32 %v447, %v450
    %vm452 = vcmp.lt.s32.totalorder %v451, 0
    %v453 = vsub.s32 0, %v451
    %v454 = vsel %vm452, %v453, %v451
    %v455 = vclz %v454
    %v456 = vsub.s32 %v455, 2
    %vm457 = vcmp.gt.s32.totalorder 0, %v456
    %v458 = vsel %vm457, 0, %v456
    %v459 = vsub.s32 32, %v458
    %v460 = vshll.u32 %v451, %v458
    %v461 = vshrl.u32 %v443, %v459
    %v462 = vor.u32 %v460, %v461
    %v463 = vsub.s32 4294967266, %v458
    %v464 = vadd.s32 %v463, 127
    %v465 = vshll.u32 %v464, 23
    %v466 = vor.u32 4788187, %v465
    %v467 = vand.u32 2147483647, %v466
    %v469 = vcvt.s32.f32 %v462
    %v470 = vmul.f32 %v469, %v467
    %v471 = vxor.u32 %v470, 2147483648
    %v472 = vsel %vm389, %v471, %v470
    %v473 = vsub.s32 4, %v449
    %v474 = vsel %vm389, %v473, %v449
    %v475 = vsel %vm388, %v177, %v472
    %v476 = vsel %vm388, 0, %v474
    %v477 = vcosq.f32.pop %v475
    %v478 = vsinq.f32.pop %v475
    %vm479 = vweird.f32 %v177
    %v480 = vadd.s32 %v476, 3
    %v481 = vand.u32 %v480, 3
    %vm482 = vcmp.lt.s32.totalorder %v481, 2
    %vm483 = vcmp.eq.s32.totalorder %v481, 0
    %v484 = vxor.u32 %v478, 2147483648
    %v485 = vsel %vm483, %v477, %v484
    %vm486 = vcmp.eq.s32.totalorder %v481, 2
    %v487 = vxor.u32 %v477, 2147483648
    %v488 = vsel %vm486, %v487, %v478
    %v489 = vsel %vm482, %v485, %v488
    %v490 = vsel %vm479, nan, %v489
    %v491 = vand.u32 2147483647, %v178
    %vm492 = vcmp.le.f32.partialorder %v491, 0.7853982
    %vm493 = vcmp.lt.s32.totalorder %v178, 0
    %v494 = vand.u32 %v178, 2139095040
    %v495 = vshrl.u32 %v494, 23
    %v496 = vsub.s32 %v495, 127
    %v497 = vand.u32 2147483647, %v178
    %v498 = vand.u32 %v497, 8388607
    %v499 = vor.u32 %v498, 8388608
    %v500 = vsub.s32 0, %v499
    %v501 = vadd.s32 %v496, 1
    %vm502 = vcmp.gt.s32.totalorder %v501, 0
    %v503 = vsel %vm502, %v501, 0
    %v504 = vshrl.u32 %v503, 5
    %v505 = vand.u32 %v503, 31
    %v506 = vsub.s32 32, %v505
    %v507 = vshrl.u32 683565275, %v506
    %v508 = vshll.u32 683565275, %v505
    %v509 = vshrl.u32 2475754826, %v506
    %v510 = vor.u32 %v508, %v509
    %v511 = vshll.u32 2475754826, %v505
    %v512 = vshrl.u32 2131351028, %v506
    %v513 = vor.u32 %v511, %v512
    %v514 = vshll.u32 2131351028, %v505
    %v515 = vshrl.u32 2102212464, %v506
    %v516 = vor.u32 %v514, %v515
    %v517 = vshll.u32 2102212464, %v505
    %v518 = vshrl.u32 920167782, %v506
    %v519 = vor.u32 %v517, %v518
    %v520 = vshll.u32 920167782, %v505
    %v521 = vshrl.u32 1326507024, %v506
    %v522 = vor.u32 %v520, %v521
    %vm523 = vcmp.lt.s32.totalorder %v504, 1
    %vm524 = vcmp.lt.s32.totalorder %v504, 2
    %vm525 = vcmp.lt.s32.totalorder %v504, 3
    %vm526 = vcmp.lt.s32.totalorder %v504, 4
    %v527 = vsel %vm523, %v507, %v510
    %v528 = vsel %vm526, %v516, 2102212464
    %v529 = vsel %vm525, %v513, %v528
    %v530 = vsel %vm524, %v527, %v529
    %v531 = vsel %vm523, %v510, %v513
    %v532 = vsel %vm526, %v519, 920167782
    %v533 = vsel %vm525, %v516, %v532
    %v534 = vsel %vm524, %v531, %v533
    %v535 = vsel %vm523, %v513, %v516
    %v536 = vsel %vm526, %v522, 1326507024
    %v537 = vsel %vm525, %v519, %v536
    %v538 = vsel %vm524, %v535, %v537
    %v539 = vshll.u32 %v499, 8
    %v540 = vmul.u32.u64.compose %v539, %v538
    %v541 = vextract.low.u32 %v540
    %v542 = vextract.high.u32 %v540
    %v543 = vmul.u32.u64.compose %v539, %v534
    %v544 = vextract.low.u32 %v543
    %v545 = vextract.high.u32 %v543
    %v546 = vmul.u32 %v539, %v530
    %v547 = vadd.s32 %v542, %v544
    %vm548 = vc.u32 %v542, %v544
    %v549 = vadd.s32 %v545, 1
    %v550 = vsel %vm548, %v549, %v545
    %v551 = vadd.s32 %v546, %v550
    %v552 = vadd.s32 %v551, 536870912
    %v553 = vshrl.u32 %v552, 30
    %v554 = vshll.u32 %v553, 30
    %v555 = vsub.s32 %v551, %v554
    %vm556 = vcmp.lt.s32.totalorder %v555, 0
    %v557 = vsub.s32 0, %v555
    %v558 = vsel %vm556, %v557, %v555
    %v559 = vclz %v558
    %v560 = vsub.s32 %v559, 2
    %vm561 = vcmp.gt.s32.totalorder 0, %v560
    %v562 = vsel %vm561, 0, %v560
    %v563 = vsub.s32 32, %v562
    %v564 = vshll.u32 %v555, %v562
    %v565 = vshrl.u32 %v547, %v563
    %v566 = vor.u32 %v564, %v565
    %v567 = vsub.s32 4294967266, %v562
    %v568 = vadd.s32 %v567, 127
    %v569 = vshll.u32 %v568, 23
    %v570 = vor.u32 4788187, %v569
    %v571 = vand.u32 2147483647, %v570
    %v573 = vcvt.s32.f32 %v566
    %v574 = vmul.f32 %v573, %v571
    %v575 = vxor.u32 %v574, 2147483648
    %v576 = vsel %vm493, %v575, %v574
    %v577 = vsub.s32 4, %v553
    %v578 = vsel %vm493, %v577, %v553
    %v579 = vsel %vm492, %v178, %v576
    %v580 = vsel %vm492, 0, %v578
    %v581 = vcosq.f32.pop %v579
    %v582 = vsinq.f32.pop %v579
    %vm583 = vweird.f32 %v178
    %v584 = vadd.s32 %v580, 3
    %v585 = vand.u32 %v584, 3
    %vm586 = vcmp.lt.s32.totalorder %v585, 2
    %vm587 = vcmp.eq.s32.totalorder %v585, 0
    %v588 = vxor.u32 %v582, 2147483648
    %v589 = vsel %vm587, %v581, %v588
    %vm590 = vcmp.eq.s32.totalorder %v585, 2
    %v591 = vxor.u32 %v581, 2147483648
    %v592 = vsel %vm590, %v591, %v582
    %v593 = vsel %vm586, %v589, %v592
    %v594 = vsel %vm583, nan, %v593
    %v595 = vand.u32 2147483647, %v175
    %vm596 = vcmp.le.f32.partialorder %v595, 0.7853982
    %vm597 = vcmp.lt.s32.totalorder %v175, 0
    %v598 = vand.u32 %v175, 2139095040
    %v599 = vshrl.u32 %v598, 23
    %v600 = vsub.s32 %v599, 127
    %v601 = vand.u32 2147483647, %v175
    %v602 = vand.u32 %v601, 8388607
    %v603 = vor.u32 %v602, 8388608
    %v604 = vsub.s32 0, %v603
    %v605 = vadd.s32 %v600, 1
    %vm606 = vcmp.gt.s32.totalorder %v605, 0
    %v607 = vsel %vm606, %v605, 0
    %v608 = vshrl.u32 %v607, 5
    %v609 = vand.u32 %v607, 31
    %v610 = vsub.s32 32, %v609
    %v611 = vshrl.u32 683565275, %v610
    %v612 = vshll.u32 683565275, %v609
    %v613 = vshrl.u32 2475754826, %v610
    %v614 = vor.u32 %v612, %v613
    %v615 = vshll.u32 2475754826, %v609
    %v616 = vshrl.u32 2131351028, %v610
    %v617 = vor.u32 %v615, %v616
    %v618 = vshll.u32 2131351028, %v609
    %v619 = vshrl.u32 2102212464, %v610
    %v620 = vor.u32 %v618, %v619
    %v621 = vshll.u32 2102212464, %v609
    %v622 = vshrl.u32 920167782, %v610
    %v623 = vor.u32 %v621, %v622
    %v624 = vshll.u32 920167782, %v609
    %v625 = vshrl.u32 1326507024, %v610
    %v626 = vor.u32 %v624, %v625
    %vm627 = vcmp.lt.s32.totalorder %v608, 1
    %vm628 = vcmp.lt.s32.totalorder %v608, 2
    %vm629 = vcmp.lt.s32.totalorder %v608, 3
    %vm630 = vcmp.lt.s32.totalorder %v608, 4
    %v631 = vsel %vm627, %v611, %v614
    %v632 = vsel %vm630, %v620, 2102212464
    %v633 = vsel %vm629, %v617, %v632
    %v634 = vsel %vm628, %v631, %v633
    %v635 = vsel %vm627, %v614, %v617
    %v636 = vsel %vm630, %v623, 920167782
    %v637 = vsel %vm629, %v620, %v636
    %v638 = vsel %vm628, %v635, %v637
    %v639 = vsel %vm627, %v617, %v620
    %v640 = vsel %vm630, %v626, 1326507024
    %v641 = vsel %vm629, %v623, %v640
    %v642 = vsel %vm628, %v639, %v641
    %v643 = vshll.u32 %v603, 8
    %v644 = vmul.u32.u64.compose %v643, %v642
    %v645 = vextract.low.u32 %v644
    %v646 = vextract.high.u32 %v644
    %v647 = vmul.u32.u64.compose %v643, %v638
    %v648 = vextract.low.u32 %v647
    %v649 = vextract.high.u32 %v647
    %v650 = vmul.u32 %v643, %v634
    %v651 = vadd.s32 %v646, %v648
    %vm652 = vc.u32 %v646, %v648
    %v653 = vadd.s32 %v649, 1
    %v654 = vsel %vm652, %v653, %v649
    %v655 = vadd.s32 %v650, %v654
    %v656 = vadd.s32 %v655, 536870912
    %v657 = vshrl.u32 %v656, 30
    %v658 = vshll.u32 %v657, 30
    %v659 = vsub.s32 %v655, %v658
    %vm660 = vcmp.lt.s32.totalorder %v659, 0
    %v661 = vsub.s32 0, %v659
    %v662 = vsel %vm660, %v661, %v659
    %v663 = vclz %v662
    %v664 = vsub.s32 %v663, 2
    %vm665 = vcmp.gt.s32.totalorder 0, %v664
    %v666 = vsel %vm665, 0, %v664
    %v667 = vsub.s32 32, %v666
    %v668 = vshll.u32 %v659, %v666
    %v669 = vshrl.u32 %v651, %v667
    %v670 = vor.u32 %v668, %v669
    %v671 = vsub.s32 4294967266, %v666
    %v672 = vadd.s32 %v671, 127
    %v673 = vshll.u32 %v672, 23
    %v674 = vor.u32 4788187, %v673
    %v675 = vand.u32 2147483647, %v674
    %v677 = vcvt.s32.f32 %v670
    %v678 = vmul.f32 %v677, %v675
    %v679 = vxor.u32 %v678, 2147483648
    %v680 = vsel %vm597, %v679, %v678
    %v681 = vsub.s32 4, %v657
    %v682 = vsel %vm597, %v681, %v657
    %v683 = vsel %vm596, %v175, %v680
    %v684 = vsel %vm596, 0, %v682
    %v685 = vcosq.f32.pop %v683
    %v686 = vsinq.f32.pop %v683
    %vm687 = vweird.f32 %v175
    %v688 = vand.u32 %v684, 3
    %vm689 = vcmp.lt.s32.totalorder %v688, 2
    %vm690 = vcmp.eq.s32.totalorder %v688, 0
    %v691 = vxor.u32 %v686, 2147483648
    %v692 = vsel %vm690, %v685, %v691
    %vm693 = vcmp.eq.s32.totalorder %v688, 2
    %v694 = vxor.u32 %v685, 2147483648
    %v695 = vsel %vm693, %v694, %v686
    %v696 = vsel %vm689, %v692, %v695
    %v697 = vsel %vm687, nan, %v696
    %v698 = vand.u32 2147483647, %v176
    %vm699 = vcmp.le.f32.partialorder %v698, 0.7853982
    %vm700 = vcmp.lt.s32.totalorder %v176, 0
    %v701 = vand.u32 %v176, 2139095040
    %v702 = vshrl.u32 %v701, 23
    %v703 = vsub.s32 %v702, 127
    %v704 = vand.u32 2147483647, %v176
    %v705 = vand.u32 %v704, 8388607
    %v706 = vor.u32 %v705, 8388608
    %v707 = vsub.s32 0, %v706
    %v708 = vadd.s32 %v703, 1
    %vm709 = vcmp.gt.s32.totalorder %v708, 0
    %v710 = vsel %vm709, %v708, 0
    %v711 = vshrl.u32 %v710, 5
    %v712 = vand.u32 %v710, 31
    %v713 = vsub.s32 32, %v712
    %v714 = vshrl.u32 683565275, %v713
    %v715 = vshll.u32 683565275, %v712
    %v716 = vshrl.u32 2475754826, %v713
    %v717 = vor.u32 %v715, %v716
    %v718 = vshll.u32 2475754826, %v712
    %v719 = vshrl.u32 2131351028, %v713
    %v720 = vor.u32 %v718, %v719
    %v721 = vshll.u32 2131351028, %v712
    %v722 = vshrl.u32 2102212464, %v713
    %v723 = vor.u32 %v721, %v722
    %v724 = vshll.u32 2102212464, %v712
    %v725 = vshrl.u32 920167782, %v713
    %v726 = vor.u32 %v724, %v725
    %v727 = vshll.u32 920167782, %v712
    %v728 = vshrl.u32 1326507024, %v713
    %v729 = vor.u32 %v727, %v728
    %vm730 = vcmp.lt.s32.totalorder %v711, 1
    %vm731 = vcmp.lt.s32.totalorder %v711, 2
    %vm732 = vcmp.lt.s32.totalorder %v711, 3
    %vm733 = vcmp.lt.s32.totalorder %v711, 4
    %v734 = vsel %vm730, %v714, %v717
    %v735 = vsel %vm733, %v723, 2102212464
    %v736 = vsel %vm732, %v720, %v735
    %v737 = vsel %vm731, %v734, %v736
    %v738 = vsel %vm730, %v717, %v720
    %v739 = vsel %vm733, %v726, 920167782
    %v740 = vsel %vm732, %v723, %v739
    %v741 = vsel %vm731, %v738, %v740
    %v742 = vsel %vm730, %v720, %v723
    %v743 = vsel %vm733, %v729, 1326507024
    %v744 = vsel %vm732, %v726, %v743
    %v745 = vsel %vm731, %v742, %v744
    %v746 = vshll.u32 %v706, 8
    %v747 = vmul.u32.u64.compose %v746, %v745
    %v748 = vextract.low.u32 %v747
    %v749 = vextract.high.u32 %v747
    %v750 = vmul.u32.u64.compose %v746, %v741
    %v751 = vextract.low.u32 %v750
    %v752 = vextract.high.u32 %v750
    %v753 = vmul.u32 %v746, %v737
    %v754 = vadd.s32 %v749, %v751
    %vm755 = vc.u32 %v749, %v751
    %v756 = vadd.s32 %v752, 1
    %v757 = vsel %vm755, %v756, %v752
    %v758 = vadd.s32 %v753, %v757
    %v759 = vadd.s32 %v758, 536870912
    %v760 = vshrl.u32 %v759, 30
    %v761 = vshll.u32 %v760, 30
    %v762 = vsub.s32 %v758, %v761
    %vm763 = vcmp.lt.s32.totalorder %v762, 0
    %v764 = vsub.s32 0, %v762
    %v765 = vsel %vm763, %v764, %v762
    %v766 = vclz %v765
    %v767 = vsub.s32 %v766, 2
    %vm768 = vcmp.gt.s32.totalorder 0, %v767
    %v769 = vsel %vm768, 0, %v767
    %v770 = vsub.s32 32, %v769
    %v771 = vshll.u32 %v762, %v769
    %v772 = vshrl.u32 %v754, %v770
    %v773 = vor.u32 %v771, %v772
    %v774 = vsub.s32 4294967266, %v769
    %v775 = vadd.s32 %v774, 127
    %v776 = vshll.u32 %v775, 23
    %v777 = vor.u32 4788187, %v776
    %v778 = vand.u32 2147483647, %v777
    %v780 = vcvt.s32.f32 %v773
    %v781 = vmul.f32 %v780, %v778
    %v782 = vxor.u32 %v781, 2147483648
    %v783 = vsel %vm700, %v782, %v781
    %v784 = vsub.s32 4, %v760
    %v785 = vsel %vm700, %v784, %v760
    %v786 = vsel %vm699, %v176, %v783
    %v787 = vsel %vm699, 0, %v785
    %v788 = vcosq.f32.pop %v786
    %v789 = vsinq.f32.pop %v786
    %vm790 = vweird.f32 %v176
    %v791 = vand.u32 %v787, 3
    %vm792 = vcmp.lt.s32.totalorder %v791, 2
    %vm793 = vcmp.eq.s32.totalorder %v791, 0
    %v794 = vxor.u32 %v789, 2147483648
    %v795 = vsel %vm793, %v788, %v794
    %vm796 = vcmp.eq.s32.totalorder %v791, 2
    %v797 = vxor.u32 %v788, 2147483648
    %v798 = vsel %vm796, %v797, %v789
    %v799 = vsel %vm792, %v795, %v798
    %v800 = vsel %vm790, nan, %v799
    %v801 = vand.u32 2147483647, %v177
    %vm802 = vcmp.le.f32.partialorder %v801, 0.7853982
    %vm803 = vcmp.lt.s32.totalorder %v177, 0
    %v804 = vand.u32 %v177, 2139095040
    %v805 = vshrl.u32 %v804, 23
    %v806 = vsub.s32 %v805, 127
    %v807 = vand.u32 2147483647, %v177
    %v808 = vand.u32 %v807, 8388607
    %v809 = vor.u32 %v808, 8388608
    %v810 = vsub.s32 0, %v809
    %v811 = vadd.s32 %v806, 1
    %vm812 = vcmp.gt.s32.totalorder %v811, 0
    %v813 = vsel %vm812, %v811, 0
    %v814 = vshrl.u32 %v813, 5
    %v815 = vand.u32 %v813, 31
    %v816 = vsub.s32 32, %v815
    %v817 = vshrl.u32 683565275, %v816
    %v818 = vshll.u32 683565275, %v815
    %v819 = vshrl.u32 2475754826, %v816
    %v820 = vor.u32 %v818, %v819
    %v821 = vshll.u32 2475754826, %v815
    %v822 = vshrl.u32 2131351028, %v816
    %v823 = vor.u32 %v821, %v822
    %v824 = vshll.u32 2131351028, %v815
    %v825 = vshrl.u32 2102212464, %v816
    %v826 = vor.u32 %v824, %v825
    %v827 = vshll.u32 2102212464, %v815
    %v828 = vshrl.u32 920167782, %v816
    %v829 = vor.u32 %v827, %v828
    %v830 = vshll.u32 920167782, %v815
    %v831 = vshrl.u32 1326507024, %v816
    %v832 = vor.u32 %v830, %v831
    %vm833 = vcmp.lt.s32.totalorder %v814, 1
    %vm834 = vcmp.lt.s32.totalorder %v814, 2
    %vm835 = vcmp.lt.s32.totalorder %v814, 3
    %vm836 = vcmp.lt.s32.totalorder %v814, 4
    %v837 = vsel %vm833, %v817, %v820
    %v838 = vsel %vm836, %v826, 2102212464
    %v839 = vsel %vm835, %v823, %v838
    %v840 = vsel %vm834, %v837, %v839
    %v841 = vsel %vm833, %v820, %v823
    %v842 = vsel %vm836, %v829, 920167782
    %v843 = vsel %vm835, %v826, %v842
    %v844 = vsel %vm834, %v841, %v843
    %v845 = vsel %vm833, %v823, %v826
    %v846 = vsel %vm836, %v832, 1326507024
    %v847 = vsel %vm835, %v829, %v846
    %v848 = vsel %vm834, %v845, %v847
    %v849 = vshll.u32 %v809, 8
    %v850 = vmul.u32.u64.compose %v849, %v848
    %v851 = vextract.low.u32 %v850
    %v852 = vextract.high.u32 %v850
    %v853 = vmul.u32.u64.compose %v849, %v844
    %v854 = vextract.low.u32 %v853
    %v855 = vextract.high.u32 %v853
    %v856 = vmul.u32 %v849, %v840
    %v857 = vadd.s32 %v852, %v854
    %vm858 = vc.u32 %v852, %v854
    %v859 = vadd.s32 %v855, 1
    %v860 = vsel %vm858, %v859, %v855
    %v861 = vadd.s32 %v856, %v860
    %v862 = vadd.s32 %v861, 536870912
    %v863 = vshrl.u32 %v862, 30
    %v864 = vshll.u32 %v863, 30
    %v865 = vsub.s32 %v861, %v864
    %vm866 = vcmp.lt.s32.totalorder %v865, 0
    %v867 = vsub.s32 0, %v865
    %v868 = vsel %vm866, %v867, %v865
    %v869 = vclz %v868
    %v870 = vsub.s32 %v869, 2
    %vm871 = vcmp.gt.s32.totalorder 0, %v870
    %v872 = vsel %vm871, 0, %v870
    %v873 = vsub.s32 32, %v872
    %v874 = vshll.u32 %v865, %v872
    %v875 = vshrl.u32 %v857, %v873
    %v876 = vor.u32 %v874, %v875
    %v877 = vsub.s32 4294967266, %v872
    %v878 = vadd.s32 %v877, 127
    %v879 = vshll.u32 %v878, 23
    %v880 = vor.u32 4788187, %v879
    %v881 = vand.u32 2147483647, %v880
    %v883 = vcvt.s32.f32 %v876
    %v884 = vmul.f32 %v883, %v881
    %v885 = vxor.u32 %v884, 2147483648
    %v886 = vsel %vm803, %v885, %v884
    %v887 = vsub.s32 4, %v863
    %v888 = vsel %vm803, %v887, %v863
    %v889 = vsel %vm802, %v177, %v886
    %v890 = vsel %vm802, 0, %v888
    %v891 = vcosq.f32.pop %v889
    %v892 = vsinq.f32.pop %v889
    %vm893 = vweird.f32 %v177
    %v894 = vand.u32 %v890, 3
    %vm895 = vcmp.lt.s32.totalorder %v894, 2
    %vm896 = vcmp.eq.s32.totalorder %v894, 0
    %v897 = vxor.u32 %v892, 2147483648
    %v898 = vsel %vm896, %v891, %v897
    %vm899 = vcmp.eq.s32.totalorder %v894, 2
    %v900 = vxor.u32 %v891, 2147483648
    %v901 = vsel %vm899, %v900, %v892
    %v902 = vsel %vm895, %v898, %v901
    %v903 = vsel %vm893, nan, %v902
    %v904 = vand.u32 2147483647, %v178
    %vm905 = vcmp.le.f32.partialorder %v904, 0.7853982
    %vm906 = vcmp.lt.s32.totalorder %v178, 0
    %v907 = vand.u32 %v178, 2139095040
    %v908 = vshrl.u32 %v907, 23
    %v909 = vsub.s32 %v908, 127
    %v910 = vand.u32 2147483647, %v178
    %v911 = vand.u32 %v910, 8388607
    %v912 = vor.u32 %v911, 8388608
    %v913 = vsub.s32 0, %v912
    %v914 = vadd.s32 %v909, 1
    %vm915 = vcmp.gt.s32.totalorder %v914, 0
    %v916 = vsel %vm915, %v914, 0
    %v917 = vshrl.u32 %v916, 5
    %v918 = vand.u32 %v916, 31
    %v919 = vsub.s32 32, %v918
    %v920 = vshrl.u32 683565275, %v919
    %v921 = vshll.u32 683565275, %v918
    %v922 = vshrl.u32 2475754826, %v919
    %v923 = vor.u32 %v921, %v922
    %v924 = vshll.u32 2475754826, %v918
    %v925 = vshrl.u32 2131351028, %v919
    %v926 = vor.u32 %v924, %v925
    %v927 = vshll.u32 2131351028, %v918
    %v928 = vshrl.u32 2102212464, %v919
    %v929 = vor.u32 %v927, %v928
    %v930 = vshll.u32 2102212464, %v918
    %v931 = vshrl.u32 920167782, %v919
    %v932 = vor.u32 %v930, %v931
    %v933 = vshll.u32 920167782, %v918
    %v934 = vshrl.u32 1326507024, %v919
    %v935 = vor.u32 %v933, %v934
    %vm936 = vcmp.lt.s32.totalorder %v917, 1
    %vm937 = vcmp.lt.s32.totalorder %v917, 2
    %vm938 = vcmp.lt.s32.totalorder %v917, 3
    %vm939 = vcmp.lt.s32.totalorder %v917, 4
    %v940 = vsel %vm936, %v920, %v923
    %v941 = vsel %vm939, %v929, 2102212464
    %v942 = vsel %vm938, %v926, %v941
    %v943 = vsel %vm937, %v940, %v942
    %v944 = vsel %vm936, %v923, %v926
    %v945 = vsel %vm939, %v932, 920167782
    %v946 = vsel %vm938, %v929, %v945
    %v947 = vsel %vm937, %v944, %v946
    %v948 = vsel %vm936, %v926, %v929
    %v949 = vsel %vm939, %v935, 1326507024
    %v950 = vsel %vm938, %v932, %v949
    %v951 = vsel %vm937, %v948, %v950
    %v952 = vshll.u32 %v912, 8
    %v953 = vmul.u32.u64.compose %v952, %v951
    %v954 = vextract.low.u32 %v953
    %v955 = vextract.high.u32 %v953
    %v956 = vmul.u32.u64.compose %v952, %v947
    %v957 = vextract.low.u32 %v956
    %v958 = vextract.high.u32 %v956
    %v959 = vmul.u32 %v952, %v943
    %v960 = vadd.s32 %v955, %v957
    %vm961 = vc.u32 %v955, %v957
    %v962 = vadd.s32 %v958, 1
    %v963 = vsel %vm961, %v962, %v958
    %v964 = vadd.s32 %v959, %v963
    %v965 = vadd.s32 %v964, 536870912
    %v966 = vshrl.u32 %v965, 30
    %v967 = vshll.u32 %v966, 30
    %v968 = vsub.s32 %v964, %v967
    %vm969 = vcmp.lt.s32.totalorder %v968, 0
    %v970 = vsub.s32 0, %v968
    %v971 = vsel %vm969, %v970, %v968
    %v972 = vclz %v971
    %v973 = vsub.s32 %v972, 2
    %vm974 = vcmp.gt.s32.totalorder 0, %v973
    %v975 = vsel %vm974, 0, %v973
    %v976 = vsub.s32 32, %v975
    %v977 = vshll.u32 %v968, %v975
    %v978 = vshrl.u32 %v960, %v976
    %v979 = vor.u32 %v977, %v978
    %v980 = vsub.s32 4294967266, %v975
    %v981 = vadd.s32 %v980, 127
    %v982 = vshll.u32 %v981, 23
    %v983 = vor.u32 4788187, %v982
    %v984 = vand.u32 2147483647, %v983
    %v986 = vcvt.s32.f32 %v979
    %v987 = vmul.f32 %v986, %v984
    %v988 = vxor.u32 %v987, 2147483648
    %v989 = vsel %vm906, %v988, %v987
    %v990 = vsub.s32 4, %v966
    %v991 = vsel %vm906, %v990, %v966
    %v992 = vsel %vm905, %v178, %v989
    %v993 = vsel %vm905, 0, %v991
    %v994 = vcosq.f32.pop %v992
    %v995 = vsinq.f32.pop %v992
    %vm996 = vweird.f32 %v178
    %v997 = vand.u32 %v993, 3
    %vm998 = vcmp.lt.s32.totalorder %v997, 2
    %vm999 = vcmp.eq.s32.totalorder %v997, 0
    %v1000 = vxor.u32 %v995, 2147483648
    %v1001 = vsel %vm999, %v994, %v1000
    %vm1002 = vcmp.eq.s32.totalorder %v997, 2
    %v1003 = vxor.u32 %v994, 2147483648
    %v1004 = vsel %vm1002, %v1003, %v995
    %v1005 = vsel %vm998, %v1001, %v1004
    %v1006 = vsel %vm996, nan, %v1005
    %s1007 = sadd.s32 0, 128
    %s1008 = sshra.s32 %s1007, 7
    %s1009 = sand.u32 %s1007, 127
    %s1010 = smul.addr %s1008, 4
    %s1011 = scalar_lea.vmem [#allocation2], %s1010
    %v1012 = vld [vmem:[%s1011] sm:$0x7]
    %v1013 = vlaneseq
    %v1014 = vshrl.u32 %v1013, 7
    %v1015 = vsub.s32 0, %v1014
    %v1016 = vrot.slane %v1012, %v1015
    %v1017 = vmul.f32 %v110, %v1016
    %v1018 = vmul.f32 %v111, %v1016
    %v1019 = vmul.f32 %v112, %v1016
    %v1020 = vmul.f32 %v113, %v1016
    %v1021 = vlaneseq
    %v1022 = vshrl.u32 %v1021, 7
    %v1023 = vsub.s32 1, %v1022
    %v1024 = vrot.slane %v1012, %v1023
    %v1025 = vmul.f32 %v126, %v1024
    %v1026 = vmul.f32 %v127, %v1024
    %v1027 = vmul.f32 %v128, %v1024
    %v1028 = vmul.f32 %v129, %v1024
    %v1029 = vadd.f32 %v1017, %v1025
    %v1030 = vadd.f32 %v1018, %v1026
    %v1031 = vadd.f32 %v1019, %v1027
    %v1032 = vadd.f32 %v1020, %v1028
    %v1033 = vlaneseq
    %v1034 = vshrl.u32 %v1033, 7
    %v1035 = vsub.s32 2, %v1034
    %v1036 = vrot.slane %v1012, %v1035
    %v1037 = vmul.f32 %v142, %v1036
    %v1038 = vmul.f32 %v143, %v1036
    %v1039 = vmul.f32 %v144, %v1036
    %v1040 = vmul.f32 %v145, %v1036
    %v1041 = vadd.f32 %v1029, %v1037
    %v1042 = vadd.f32 %v1030, %v1038
    %v1043 = vadd.f32 %v1031, %v1039
    %v1044 = vadd.f32 %v1032, %v1040
    %v1045 = vand.u32 2147483647, %v1041
    %vm1046 = vcmp.le.f32.partialorder %v1045, 0.7853982
    %vm1047 = vcmp.lt.s32.totalorder %v1041, 0
    %v1048 = vand.u32 %v1041, 2139095040
    %v1049 = vshrl.u32 %v1048, 23
    %v1050 = vsub.s32 %v1049, 127
    %v1051 = vand.u32 2147483647, %v1041
    %v1052 = vand.u32 %v1051, 8388607
    %v1053 = vor.u32 %v1052, 8388608
    %v1054 = vsub.s32 0, %v1053
    %v1055 = vadd.s32 %v1050, 1
    %vm1056 = vcmp.gt.s32.totalorder %v1055, 0
    %v1057 = vsel %vm1056, %v1055, 0
    %v1058 = vshrl.u32 %v1057, 5
    %v1059 = vand.u32 %v1057, 31
    %v1060 = vsub.s32 32, %v1059
    %v1061 = vshrl.u32 683565275, %v1060
    %v1062 = vshll.u32 683565275, %v1059
    %v1063 = vshrl.u32 2475754826, %v1060
    %v1064 = vor.u32 %v1062, %v1063
    %v1065 = vshll.u32 2475754826, %v1059
    %v1066 = vshrl.u32 2131351028, %v1060
    %v1067 = vor.u32 %v1065, %v1066
    %v1068 = vshll.u32 2131351028, %v1059
    %v1069 = vshrl.u32 2102212464, %v1060
    %v1070 = vor.u32 %v1068, %v1069
    %v1071 = vshll.u32 2102212464, %v1059
    %v1072 = vshrl.u32 920167782, %v1060
    %v1073 = vor.u32 %v1071, %v1072
    %v1074 = vshll.u32 920167782, %v1059
    %v1075 = vshrl.u32 1326507024, %v1060
    %v1076 = vor.u32 %v1074, %v1075
    %vm1077 = vcmp.lt.s32.totalorder %v1058, 1
    %vm1078 = vcmp.lt.s32.totalorder %v1058, 2
    %vm1079 = vcmp.lt.s32.totalorder %v1058, 3
    %vm1080 = vcmp.lt.s32.totalorder %v1058, 4
    %v1081 = vsel %vm1077, %v1061, %v1064
    %v1082 = vsel %vm1080, %v1070, 2102212464
    %v1083 = vsel %vm1079, %v1067, %v1082
    %v1084 = vsel %vm1078, %v1081, %v1083
    %v1085 = vsel %vm1077, %v1064, %v1067
    %v1086 = vsel %vm1080, %v1073, 920167782
    %v1087 = vsel %vm1079, %v1070, %v1086
    %v1088 = vsel %vm1078, %v1085, %v1087
    %v1089 = vsel %vm1077, %v1067, %v1070
    %v1090 = vsel %vm1080, %v1076, 1326507024
    %v1091 = vsel %vm1079, %v1073, %v1090
    %v1092 = vsel %vm1078, %v1089, %v1091
    %v1093 = vshll.u32 %v1053, 8
    %v1094 = vmul.u32.u64.compose %v1093, %v1092
    %v1095 = vextract.low.u32 %v1094
    %v1096 = vextract.high.u32 %v1094
    %v1097 = vmul.u32.u64.compose %v1093, %v1088
    %v1098 = vextract.low.u32 %v1097
    %v1099 = vextract.high.u32 %v1097
    %v1100 = vmul.u32 %v1093, %v1084
    %v1101 = vadd.s32 %v1096, %v1098
    %vm1102 = vc.u32 %v1096, %v1098
    %v1103 = vadd.s32 %v1099, 1
    %v1104 = vsel %vm1102, %v1103, %v1099
    %v1105 = vadd.s32 %v1100, %v1104
    %v1106 = vadd.s32 %v1105, 536870912
    %v1107 = vshrl.u32 %v1106, 30
    %v1108 = vshll.u32 %v1107, 30
    %v1109 = vsub.s32 %v1105, %v1108
    %vm1110 = vcmp.lt.s32.totalorder %v1109, 0
    %v1111 = vsub.s32 0, %v1109
    %v1112 = vsel %vm1110, %v1111, %v1109
    %v1113 = vclz %v1112
    %v1114 = vsub.s32 %v1113, 2
    %vm1115 = vcmp.gt.s32.totalorder 0, %v1114
    %v1116 = vsel %vm1115, 0, %v1114
    %v1117 = vsub.s32 32, %v1116
    %v1118 = vshll.u32 %v1109, %v1116
    %v1119 = vshrl.u32 %v1101, %v1117
    %v1120 = vor.u32 %v1118, %v1119
    %v1121 = vsub.s32 4294967266, %v1116
    %v1122 = vadd.s32 %v1121, 127
    %v1123 = vshll.u32 %v1122, 23
    %v1124 = vor.u32 4788187, %v1123
    %v1125 = vand.u32 2147483647, %v1124
    %v1127 = vcvt.s32.f32 %v1120
    %v1128 = vmul.f32 %v1127, %v1125
    %v1129 = vxor.u32 %v1128, 2147483648
    %v1130 = vsel %vm1047, %v1129, %v1128
    %v1131 = vsub.s32 4, %v1107
    %v1132 = vsel %vm1047, %v1131, %v1107
    %v1133 = vsel %vm1046, %v1041, %v1130
    %v1134 = vsel %vm1046, 0, %v1132
    %v1135 = vcosq.f32.pop %v1133
    %v1136 = vsinq.f32.pop %v1133
    %vm1137 = vweird.f32 %v1041
    %v1138 = vadd.s32 %v1134, 3
    %v1139 = vand.u32 %v1138, 3
    %vm1140 = vcmp.lt.s32.totalorder %v1139, 2
    %vm1141 = vcmp.eq.s32.totalorder %v1139, 0
    %v1142 = vxor.u32 %v1136, 2147483648
    %v1143 = vsel %vm1141, %v1135, %v1142
    %vm1144 = vcmp.eq.s32.totalorder %v1139, 2
    %v1145 = vxor.u32 %v1135, 2147483648
    %v1146 = vsel %vm1144, %v1145, %v1136
    %v1147 = vsel %vm1140, %v1143, %v1146
    %v1148 = vsel %vm1137, nan, %v1147
    %v1149 = vand.u32 2147483647, %v1042
    %vm1150 = vcmp.le.f32.partialorder %v1149, 0.7853982
    %vm1151 = vcmp.lt.s32.totalorder %v1042, 0
    %v1152 = vand.u32 %v1042, 2139095040
    %v1153 = vshrl.u32 %v1152, 23
    %v1154 = vsub.s32 %v1153, 127
    %v1155 = vand.u32 2147483647, %v1042
    %v1156 = vand.u32 %v1155, 8388607
    %v1157 = vor.u32 %v1156, 8388608
    %v1158 = vsub.s32 0, %v1157
    %v1159 = vadd.s32 %v1154, 1
    %vm1160 = vcmp.gt.s32.totalorder %v1159, 0
    %v1161 = vsel %vm1160, %v1159, 0
    %v1162 = vshrl.u32 %v1161, 5
    %v1163 = vand.u32 %v1161, 31
    %v1164 = vsub.s32 32, %v1163
    %v1165 = vshrl.u32 683565275, %v1164
    %v1166 = vshll.u32 683565275, %v1163
    %v1167 = vshrl.u32 2475754826, %v1164
    %v1168 = vor.u32 %v1166, %v1167
    %v1169 = vshll.u32 2475754826, %v1163
    %v1170 = vshrl.u32 2131351028, %v1164
    %v1171 = vor.u32 %v1169, %v1170
    %v1172 = vshll.u32 2131351028, %v1163
    %v1173 = vshrl.u32 2102212464, %v1164
    %v1174 = vor.u32 %v1172, %v1173
    %v1175 = vshll.u32 2102212464, %v1163
    %v1176 = vshrl.u32 920167782, %v1164
    %v1177 = vor.u32 %v1175, %v1176
    %v1178 = vshll.u32 920167782, %v1163
    %v1179 = vshrl.u32 1326507024, %v1164
    %v1180 = vor.u32 %v1178, %v1179
    %vm1181 = vcmp.lt.s32.totalorder %v1162, 1
    %vm1182 = vcmp.lt.s32.totalorder %v1162, 2
    %vm1183 = vcmp.lt.s32.totalorder %v1162, 3
    %vm1184 = vcmp.lt.s32.totalorder %v1162, 4
    %v1185 = vsel %vm1181, %v1165, %v1168
    %v1186 = vsel %vm1184, %v1174, 2102212464
    %v1187 = vsel %vm1183, %v1171, %v1186
    %v1188 = vsel %vm1182, %v1185, %v1187
    %v1189 = vsel %vm1181, %v1168, %v1171
    %v1190 = vsel %vm1184, %v1177, 920167782
    %v1191 = vsel %vm1183, %v1174, %v1190
    %v1192 = vsel %vm1182, %v1189, %v1191
    %v1193 = vsel %vm1181, %v1171, %v1174
    %v1194 = vsel %vm1184, %v1180, 1326507024
    %v1195 = vsel %vm1183, %v1177, %v1194
    %v1196 = vsel %vm1182, %v1193, %v1195
    %v1197 = vshll.u32 %v1157, 8
    %v1198 = vmul.u32.u64.compose %v1197, %v1196
    %v1199 = vextract.low.u32 %v1198
    %v1200 = vextract.high.u32 %v1198
    %v1201 = vmul.u32.u64.compose %v1197, %v1192
    %v1202 = vextract.low.u32 %v1201
    %v1203 = vextract.high.u32 %v1201
    %v1204 = vmul.u32 %v1197, %v1188
    %v1205 = vadd.s32 %v1200, %v1202
    %vm1206 = vc.u32 %v1200, %v1202
    %v1207 = vadd.s32 %v1203, 1
    %v1208 = vsel %vm1206, %v1207, %v1203
    %v1209 = vadd.s32 %v1204, %v1208
    %v1210 = vadd.s32 %v1209, 536870912
    %v1211 = vshrl.u32 %v1210, 30
    %v1212 = vshll.u32 %v1211, 30
    %v1213 = vsub.s32 %v1209, %v1212
    %vm1214 = vcmp.lt.s32.totalorder %v1213, 0
    %v1215 = vsub.s32 0, %v1213
    %v1216 = vsel %vm1214, %v1215, %v1213
    %v1217 = vclz %v1216
    %v1218 = vsub.s32 %v1217, 2
    %vm1219 = vcmp.gt.s32.totalorder 0, %v1218
    %v1220 = vsel %vm1219, 0, %v1218
    %v1221 = vsub.s32 32, %v1220
    %v1222 = vshll.u32 %v1213, %v1220
    %v1223 = vshrl.u32 %v1205, %v1221
    %v1224 = vor.u32 %v1222, %v1223
    %v1225 = vsub.s32 4294967266, %v1220
    %v1226 = vadd.s32 %v1225, 127
    %v1227 = vshll.u32 %v1226, 23
    %v1228 = vor.u32 4788187, %v1227
    %v1229 = vand.u32 2147483647, %v1228
    %v1231 = vcvt.s32.f32 %v1224
    %v1232 = vmul.f32 %v1231, %v1229
    %v1233 = vxor.u32 %v1232, 2147483648
    %v1234 = vsel %vm1151, %v1233, %v1232
    %v1235 = vsub.s32 4, %v1211
    %v1236 = vsel %vm1151, %v1235, %v1211
    %v1237 = vsel %vm1150, %v1042, %v1234
    %v1238 = vsel %vm1150, 0, %v1236
    %v1239 = vcosq.f32.pop %v1237
    %v1240 = vsinq.f32.pop %v1237
    %vm1241 = vweird.f32 %v1042
    %v1242 = vadd.s32 %v1238, 3
    %v1243 = vand.u32 %v1242, 3
    %vm1244 = vcmp.lt.s32.totalorder %v1243, 2
    %vm1245 = vcmp.eq.s32.totalorder %v1243, 0
    %v1246 = vxor.u32 %v1240, 2147483648
    %v1247 = vsel %vm1245, %v1239, %v1246
    %vm1248 = vcmp.eq.s32.totalorder %v1243, 2
    %v1249 = vxor.u32 %v1239, 2147483648
    %v1250 = vsel %vm1248, %v1249, %v1240
    %v1251 = vsel %vm1244, %v1247, %v1250
    %v1252 = vsel %vm1241, nan, %v1251
    %v1253 = vand.u32 2147483647, %v1043
    %vm1254 = vcmp.le.f32.partialorder %v1253, 0.7853982
    %vm1255 = vcmp.lt.s32.totalorder %v1043, 0
    %v1256 = vand.u32 %v1043, 2139095040
    %v1257 = vshrl.u32 %v1256, 23
    %v1258 = vsub.s32 %v1257, 127
    %v1259 = vand.u32 2147483647, %v1043
    %v1260 = vand.u32 %v1259, 8388607
    %v1261 = vor.u32 %v1260, 8388608
    %v1262 = vsub.s32 0, %v1261
    %v1263 = vadd.s32 %v1258, 1
    %vm1264 = vcmp.gt.s32.totalorder %v1263, 0
    %v1265 = vsel %vm1264, %v1263, 0
    %v1266 = vshrl.u32 %v1265, 5
    %v1267 = vand.u32 %v1265, 31
    %v1268 = vsub.s32 32, %v1267
    %v1269 = vshrl.u32 683565275, %v1268
    %v1270 = vshll.u32 683565275, %v1267
    %v1271 = vshrl.u32 2475754826, %v1268
    %v1272 = vor.u32 %v1270, %v1271
    %v1273 = vshll.u32 2475754826, %v1267
    %v1274 = vshrl.u32 2131351028, %v1268
    %v1275 = vor.u32 %v1273, %v1274
    %v1276 = vshll.u32 2131351028, %v1267
    %v1277 = vshrl.u32 2102212464, %v1268
    %v1278 = vor.u32 %v1276, %v1277
    %v1279 = vshll.u32 2102212464, %v1267
    %v1280 = vshrl.u32 920167782, %v1268
    %v1281 = vor.u32 %v1279, %v1280
    %v1282 = vshll.u32 920167782, %v1267
    %v1283 = vshrl.u32 1326507024, %v1268
    %v1284 = vor.u32 %v1282, %v1283
    %vm1285 = vcmp.lt.s32.totalorder %v1266, 1
    %vm1286 = vcmp.lt.s32.totalorder %v1266, 2
    %vm1287 = vcmp.lt.s32.totalorder %v1266, 3
    %vm1288 = vcmp.lt.s32.totalorder %v1266, 4
    %v1289 = vsel %vm1285, %v1269, %v1272
    %v1290 = vsel %vm1288, %v1278, 2102212464
    %v1291 = vsel %vm1287, %v1275, %v1290
    %v1292 = vsel %vm1286, %v1289, %v1291
    %v1293 = vsel %vm1285, %v1272, %v1275
    %v1294 = vsel %vm1288, %v1281, 920167782
    %v1295 = vsel %vm1287, %v1278, %v1294
    %v1296 = vsel %vm1286, %v1293, %v1295
    %v1297 = vsel %vm1285, %v1275, %v1278
    %v1298 = vsel %vm1288, %v1284, 1326507024
    %v1299 = vsel %vm1287, %v1281, %v1298
    %v1300 = vsel %vm1286, %v1297, %v1299
    %v1301 = vshll.u32 %v1261, 8
    %v1302 = vmul.u32.u64.compose %v1301, %v1300
    %v1303 = vextract.low.u32 %v1302
    %v1304 = vextract.high.u32 %v1302
    %v1305 = vmul.u32.u64.compose %v1301, %v1296
    %v1306 = vextract.low.u32 %v1305
    %v1307 = vextract.high.u32 %v1305
    %v1308 = vmul.u32 %v1301, %v1292
    %v1309 = vadd.s32 %v1304, %v1306
    %vm1310 = vc.u32 %v1304, %v1306
    %v1311 = vadd.s32 %v1307, 1
    %v1312 = vsel %vm1310, %v1311, %v1307
    %v1313 = vadd.s32 %v1308, %v1312
    %v1314 = vadd.s32 %v1313, 536870912
    %v1315 = vshrl.u32 %v1314, 30
    %v1316 = vshll.u32 %v1315, 30
    %v1317 = vsub.s32 %v1313, %v1316
    %vm1318 = vcmp.lt.s32.totalorder %v1317, 0
    %v1319 = vsub.s32 0, %v1317
    %v1320 = vsel %vm1318, %v1319, %v1317
    %v1321 = vclz %v1320
    %v1322 = vsub.s32 %v1321, 2
    %vm1323 = vcmp.gt.s32.totalorder 0, %v1322
    %v1324 = vsel %vm1323, 0, %v1322
    %v1325 = vsub.s32 32, %v1324
    %v1326 = vshll.u32 %v1317, %v1324
    %v1327 = vshrl.u32 %v1309, %v1325
    %v1328 = vor.u32 %v1326, %v1327
    %v1329 = vsub.s32 4294967266, %v1324
    %v1330 = vadd.s32 %v1329, 127
    %v1331 = vshll.u32 %v1330, 23
    %v1332 = vor.u32 4788187, %v1331
    %v1333 = vand.u32 2147483647, %v1332
    %v1335 = vcvt.s32.f32 %v1328
    %v1336 = vmul.f32 %v1335, %v1333
    %v1337 = vxor.u32 %v1336, 2147483648
    %v1338 = vsel %vm1255, %v1337, %v1336
    %v1339 = vsub.s32 4, %v1315
    %v1340 = vsel %vm1255, %v1339, %v1315
    %v1341 = vsel %vm1254, %v1043, %v1338
    %v1342 = vsel %vm1254, 0, %v1340
    %v1343 = vcosq.f32.pop %v1341
    %v1344 = vsinq.f32.pop %v1341
    %vm1345 = vweird.f32 %v1043
    %v1346 = vadd.s32 %v1342, 3
    %v1347 = vand.u32 %v1346, 3
    %vm1348 = vcmp.lt.s32.totalorder %v1347, 2
    %vm1349 = vcmp.eq.s32.totalorder %v1347, 0
    %v1350 = vxor.u32 %v1344, 2147483648
    %v1351 = vsel %vm1349, %v1343, %v1350
    %vm1352 = vcmp.eq.s32.totalorder %v1347, 2
    %v1353 = vxor.u32 %v1343, 2147483648
    %v1354 = vsel %vm1352, %v1353, %v1344
    %v1355 = vsel %vm1348, %v1351, %v1354
    %v1356 = vsel %vm1345, nan, %v1355
    %v1357 = vand.u32 2147483647, %v1044
    %vm1358 = vcmp.le.f32.partialorder %v1357, 0.7853982
    %vm1359 = vcmp.lt.s32.totalorder %v1044, 0
    %v1360 = vand.u32 %v1044, 2139095040
    %v1361 = vshrl.u32 %v1360, 23
    %v1362 = vsub.s32 %v1361, 127
    %v1363 = vand.u32 2147483647, %v1044
    %v1364 = vand.u32 %v1363, 8388607
    %v1365 = vor.u32 %v1364, 8388608
    %v1366 = vsub.s32 0, %v1365
    %v1367 = vadd.s32 %v1362, 1
    %vm1368 = vcmp.gt.s32.totalorder %v1367, 0
    %v1369 = vsel %vm1368, %v1367, 0
    %v1370 = vshrl.u32 %v1369, 5
    %v1371 = vand.u32 %v1369, 31
    %v1372 = vsub.s32 32, %v1371
    %v1373 = vshrl.u32 683565275, %v1372
    %v1374 = vshll.u32 683565275, %v1371
    %v1375 = vshrl.u32 2475754826, %v1372
    %v1376 = vor.u32 %v1374, %v1375
    %v1377 = vshll.u32 2475754826, %v1371
    %v1378 = vshrl.u32 2131351028, %v1372
    %v1379 = vor.u32 %v1377, %v1378
    %v1380 = vshll.u32 2131351028, %v1371
    %v1381 = vshrl.u32 2102212464, %v1372
    %v1382 = vor.u32 %v1380, %v1381
    %v1383 = vshll.u32 2102212464, %v1371
    %v1384 = vshrl.u32 920167782, %v1372
    %v1385 = vor.u32 %v1383, %v1384
    %v1386 = vshll.u32 920167782, %v1371
    %v1387 = vshrl.u32 1326507024, %v1372
    %v1388 = vor.u32 %v1386, %v1387
    %vm1389 = vcmp.lt.s32.totalorder %v1370, 1
    %vm1390 = vcmp.lt.s32.totalorder %v1370, 2
    %vm1391 = vcmp.lt.s32.totalorder %v1370, 3
    %vm1392 = vcmp.lt.s32.totalorder %v1370, 4
    %v1393 = vsel %vm1389, %v1373, %v1376
    %v1394 = vsel %vm1392, %v1382, 2102212464
    %v1395 = vsel %vm1391, %v1379, %v1394
    %v1396 = vsel %vm1390, %v1393, %v1395
    %v1397 = vsel %vm1389, %v1376, %v1379
    %v1398 = vsel %vm1392, %v1385, 920167782
    %v1399 = vsel %vm1391, %v1382, %v1398
    %v1400 = vsel %vm1390, %v1397, %v1399
    %v1401 = vsel %vm1389, %v1379, %v1382
    %v1402 = vsel %vm1392, %v1388, 1326507024
    %v1403 = vsel %vm1391, %v1385, %v1402
    %v1404 = vsel %vm1390, %v1401, %v1403
    %v1405 = vshll.u32 %v1365, 8
    %v1406 = vmul.u32.u64.compose %v1405, %v1404
    %v1407 = vextract.low.u32 %v1406
    %v1408 = vextract.high.u32 %v1406
    %v1409 = vmul.u32.u64.compose %v1405, %v1400
    %v1410 = vextract.low.u32 %v1409
    %v1411 = vextract.high.u32 %v1409
    %v1412 = vmul.u32 %v1405, %v1396
    %v1413 = vadd.s32 %v1408, %v1410
    %vm1414 = vc.u32 %v1408, %v1410
    %v1415 = vadd.s32 %v1411, 1
    %v1416 = vsel %vm1414, %v1415, %v1411
    %v1417 = vadd.s32 %v1412, %v1416
    %v1418 = vadd.s32 %v1417, 536870912
    %v1419 = vshrl.u32 %v1418, 30
    %v1420 = vshll.u32 %v1419, 30
    %v1421 = vsub.s32 %v1417, %v1420
    %vm1422 = vcmp.lt.s32.totalorder %v1421, 0
    %v1423 = vsub.s32 0, %v1421
    %v1424 = vsel %vm1422, %v1423, %v1421
    %v1425 = vclz %v1424
    %v1426 = vsub.s32 %v1425, 2
    %vm1427 = vcmp.gt.s32.totalorder 0, %v1426
    %v1428 = vsel %vm1427, 0, %v1426
    %v1429 = vsub.s32 32, %v1428
    %v1430 = vshll.u32 %v1421, %v1428
    %v1431 = vshrl.u32 %v1413, %v1429
    %v1432 = vor.u32 %v1430, %v1431
    %v1433 = vsub.s32 4294967266, %v1428
    %v1434 = vadd.s32 %v1433, 127
    %v1435 = vshll.u32 %v1434, 23
    %v1436 = vor.u32 4788187, %v1435
    %v1437 = vand.u32 2147483647, %v1436
    %v1439 = vcvt.s32.f32 %v1432
    %v1440 = vmul.f32 %v1439, %v1437
    %v1441 = vxor.u32 %v1440, 2147483648
    %v1442 = vsel %vm1359, %v1441, %v1440
    %v1443 = vsub.s32 4, %v1419
    %v1444 = vsel %vm1359, %v1443, %v1419
    %v1445 = vsel %vm1358, %v1044, %v1442
    %v1446 = vsel %vm1358, 0, %v1444
    %v1447 = vcosq.f32.pop %v1445
    %v1448 = vsinq.f32.pop %v1445
    %vm1449 = vweird.f32 %v1044
    %v1450 = vadd.s32 %v1446, 3
    %v1451 = vand.u32 %v1450, 3
    %vm1452 = vcmp.lt.s32.totalorder %v1451, 2
    %vm1453 = vcmp.eq.s32.totalorder %v1451, 0
    %v1454 = vxor.u32 %v1448, 2147483648
    %v1455 = vsel %vm1453, %v1447, %v1454
    %vm1456 = vcmp.eq.s32.totalorder %v1451, 2
    %v1457 = vxor.u32 %v1447, 2147483648
    %v1458 = vsel %vm1456, %v1457, %v1448
    %v1459 = vsel %vm1452, %v1455, %v1458
    %v1460 = vsel %vm1449, nan, %v1459
    %v1461 = vand.u32 2147483647, %v1041
    %vm1462 = vcmp.le.f32.partialorder %v1461, 0.7853982
    %vm1463 = vcmp.lt.s32.totalorder %v1041, 0
    %v1464 = vand.u32 %v1041, 2139095040
    %v1465 = vshrl.u32 %v1464, 23
    %v1466 = vsub.s32 %v1465, 127
    %v1467 = vand.u32 2147483647, %v1041
    %v1468 = vand.u32 %v1467, 8388607
    %v1469 = vor.u32 %v1468, 8388608
    %v1470 = vsub.s32 0, %v1469
    %v1471 = vadd.s32 %v1466, 1
    %vm1472 = vcmp.gt.s32.totalorder %v1471, 0
    %v1473 = vsel %vm1472, %v1471, 0
    %v1474 = vshrl.u32 %v1473, 5
    %v1475 = vand.u32 %v1473, 31
    %v1476 = vsub.s32 32, %v1475
    %v1477 = vshrl.u32 683565275, %v1476
    %v1478 = vshll.u32 683565275, %v1475
    %v1479 = vshrl.u32 2475754826, %v1476
    %v1480 = vor.u32 %v1478, %v1479
    %v1481 = vshll.u32 2475754826, %v1475
    %v1482 = vshrl.u32 2131351028, %v1476
    %v1483 = vor.u32 %v1481, %v1482
    %v1484 = vshll.u32 2131351028, %v1475
    %v1485 = vshrl.u32 2102212464, %v1476
    %v1486 = vor.u32 %v1484, %v1485
    %v1487 = vshll.u32 2102212464, %v1475
    %v1488 = vshrl.u32 920167782, %v1476
    %v1489 = vor.u32 %v1487, %v1488
    %v1490 = vshll.u32 920167782, %v1475
    %v1491 = vshrl.u32 1326507024, %v1476
    %v1492 = vor.u32 %v1490, %v1491
    %vm1493 = vcmp.lt.s32.totalorder %v1474, 1
    %vm1494 = vcmp.lt.s32.totalorder %v1474, 2
    %vm1495 = vcmp.lt.s32.totalorder %v1474, 3
    %vm1496 = vcmp.lt.s32.totalorder %v1474, 4
    %v1497 = vsel %vm1493, %v1477, %v1480
    %v1498 = vsel %vm1496, %v1486, 2102212464
    %v1499 = vsel %vm1495, %v1483, %v1498
    %v1500 = vsel %vm1494, %v1497, %v1499
    %v1501 = vsel %vm1493, %v1480, %v1483
    %v1502 = vsel %vm1496, %v1489, 920167782
    %v1503 = vsel %vm1495, %v1486, %v1502
    %v1504 = vsel %vm1494, %v1501, %v1503
    %v1505 = vsel %vm1493, %v1483, %v1486
    %v1506 = vsel %vm1496, %v1492, 1326507024
    %v1507 = vsel %vm1495, %v1489, %v1506
    %v1508 = vsel %vm1494, %v1505, %v1507
    %v1509 = vshll.u32 %v1469, 8
    %v1510 = vmul.u32.u64.compose %v1509, %v1508
    %v1511 = vextract.low.u32 %v1510
    %v1512 = vextract.high.u32 %v1510
    %v1513 = vmul.u32.u64.compose %v1509, %v1504
    %v1514 = vextract.low.u32 %v1513
    %v1515 = vextract.high.u32 %v1513
    %v1516 = vmul.u32 %v1509, %v1500
    %v1517 = vadd.s32 %v1512, %v1514
    %vm1518 = vc.u32 %v1512, %v1514
    %v1519 = vadd.s32 %v1515, 1
    %v1520 = vsel %vm1518, %v1519, %v1515
    %v1521 = vadd.s32 %v1516, %v1520
    %v1522 = vadd.s32 %v1521, 536870912
    %v1523 = vshrl.u32 %v1522, 30
    %v1524 = vshll.u32 %v1523, 30
    %v1525 = vsub.s32 %v1521, %v1524
    %vm1526 = vcmp.lt.s32.totalorder %v1525, 0
    %v1527 = vsub.s32 0, %v1525
    %v1528 = vsel %vm1526, %v1527, %v1525
    %v1529 = vclz %v1528
    %v1530 = vsub.s32 %v1529, 2
    %vm1531 = vcmp.gt.s32.totalorder 0, %v1530
    %v1532 = vsel %vm1531, 0, %v1530
    %v1533 = vsub.s32 32, %v1532
    %v1534 = vshll.u32 %v1525, %v1532
    %v1535 = vshrl.u32 %v1517, %v1533
    %v1536 = vor.u32 %v1534, %v1535
    %v1537 = vsub.s32 4294967266, %v1532
    %v1538 = vadd.s32 %v1537, 127
    %v1539 = vshll.u32 %v1538, 23
    %v1540 = vor.u32 4788187, %v1539
    %v1541 = vand.u32 2147483647, %v1540
    %v1543 = vcvt.s32.f32 %v1536
    %v1544 = vmul.f32 %v1543, %v1541
    %v1545 = vxor.u32 %v1544, 2147483648
    %v1546 = vsel %vm1463, %v1545, %v1544
    %v1547 = vsub.s32 4, %v1523
    %v1548 = vsel %vm1463, %v1547, %v1523
    %v1549 = vsel %vm1462, %v1041, %v1546
    %v1550 = vsel %vm1462, 0, %v1548
    %v1551 = vcosq.f32.pop %v1549
    %v1552 = vsinq.f32.pop %v1549
    %vm1553 = vweird.f32 %v1041
    %v1554 = vand.u32 %v1550, 3
    %vm1555 = vcmp.lt.s32.totalorder %v1554, 2
    %vm1556 = vcmp.eq.s32.totalorder %v1554, 0
    %v1557 = vxor.u32 %v1552, 2147483648
    %v1558 = vsel %vm1556, %v1551, %v1557
    %vm1559 = vcmp.eq.s32.totalorder %v1554, 2
    %v1560 = vxor.u32 %v1551, 2147483648
    %v1561 = vsel %vm1559, %v1560, %v1552
    %v1562 = vsel %vm1555, %v1558, %v1561
    %v1563 = vsel %vm1553, nan, %v1562
    %v1564 = vand.u32 2147483647, %v1042
    %vm1565 = vcmp.le.f32.partialorder %v1564, 0.7853982
    %vm1566 = vcmp.lt.s32.totalorder %v1042, 0
    %v1567 = vand.u32 %v1042, 2139095040
    %v1568 = vshrl.u32 %v1567, 23
    %v1569 = vsub.s32 %v1568, 127
    %v1570 = vand.u32 2147483647, %v1042
    %v1571 = vand.u32 %v1570, 8388607
    %v1572 = vor.u32 %v1571, 8388608
    %v1573 = vsub.s32 0, %v1572
    %v1574 = vadd.s32 %v1569, 1
    %vm1575 = vcmp.gt.s32.totalorder %v1574, 0
    %v1576 = vsel %vm1575, %v1574, 0
    %v1577 = vshrl.u32 %v1576, 5
    %v1578 = vand.u32 %v1576, 31
    %v1579 = vsub.s32 32, %v1578
    %v1580 = vshrl.u32 683565275, %v1579
    %v1581 = vshll.u32 683565275, %v1578
    %v1582 = vshrl.u32 2475754826, %v1579
    %v1583 = vor.u32 %v1581, %v1582
    %v1584 = vshll.u32 2475754826, %v1578
    %v1585 = vshrl.u32 2131351028, %v1579
    %v1586 = vor.u32 %v1584, %v1585
    %v1587 = vshll.u32 2131351028, %v1578
    %v1588 = vshrl.u32 2102212464, %v1579
    %v1589 = vor.u32 %v1587, %v1588
    %v1590 = vshll.u32 2102212464, %v1578
    %v1591 = vshrl.u32 920167782, %v1579
    %v1592 = vor.u32 %v1590, %v1591
    %v1593 = vshll.u32 920167782, %v1578
    %v1594 = vshrl.u32 1326507024, %v1579
    %v1595 = vor.u32 %v1593, %v1594
    %vm1596 = vcmp.lt.s32.totalorder %v1577, 1
    %vm1597 = vcmp.lt.s32.totalorder %v1577, 2
    %vm1598 = vcmp.lt.s32.totalorder %v1577, 3
    %vm1599 = vcmp.lt.s32.totalorder %v1577, 4
    %v1600 = vsel %vm1596, %v1580, %v1583
    %v1601 = vsel %vm1599, %v1589, 2102212464
    %v1602 = vsel %vm1598, %v1586, %v1601
    %v1603 = vsel %vm1597, %v1600, %v1602
    %v1604 = vsel %vm1596, %v1583, %v1586
    %v1605 = vsel %vm1599, %v1592, 920167782
    %v1606 = vsel %vm1598, %v1589, %v1605
    %v1607 = vsel %vm1597, %v1604, %v1606
    %v1608 = vsel %vm1596, %v1586, %v1589
    %v1609 = vsel %vm1599, %v1595, 1326507024
    %v1610 = vsel %vm1598, %v1592, %v1609
    %v1611 = vsel %vm1597, %v1608, %v1610
    %v1612 = vshll.u32 %v1572, 8
    %v1613 = vmul.u32.u64.compose %v1612, %v1611
    %v1614 = vextract.low.u32 %v1613
    %v1615 = vextract.high.u32 %v1613
    %v1616 = vmul.u32.u64.compose %v1612, %v1607
    %v1617 = vextract.low.u32 %v1616
    %v1618 = vextract.high.u32 %v1616
    %v1619 = vmul.u32 %v1612, %v1603
    %v1620 = vadd.s32 %v1615, %v1617
    %vm1621 = vc.u32 %v1615, %v1617
    %v1622 = vadd.s32 %v1618, 1
    %v1623 = vsel %vm1621, %v1622, %v1618
    %v1624 = vadd.s32 %v1619, %v1623
    %v1625 = vadd.s32 %v1624, 536870912
    %v1626 = vshrl.u32 %v1625, 30
    %v1627 = vshll.u32 %v1626, 30
    %v1628 = vsub.s32 %v1624, %v1627
    %vm1629 = vcmp.lt.s32.totalorder %v1628, 0
    %v1630 = vsub.s32 0, %v1628
    %v1631 = vsel %vm1629, %v1630, %v1628
    %v1632 = vclz %v1631
    %v1633 = vsub.s32 %v1632, 2
    %vm1634 = vcmp.gt.s32.totalorder 0, %v1633
    %v1635 = vsel %vm1634, 0, %v1633
    %v1636 = vsub.s32 32, %v1635
    %v1637 = vshll.u32 %v1628, %v1635
    %v1638 = vshrl.u32 %v1620, %v1636
    %v1639 = vor.u32 %v1637, %v1638
    %v1640 = vsub.s32 4294967266, %v1635
    %v1641 = vadd.s32 %v1640, 127
    %v1642 = vshll.u32 %v1641, 23
    %v1643 = vor.u32 4788187, %v1642
    %v1644 = vand.u32 2147483647, %v1643
    %v1646 = vcvt.s32.f32 %v1639
    %v1647 = vmul.f32 %v1646, %v1644
    %v1648 = vxor.u32 %v1647, 2147483648
    %v1649 = vsel %vm1566, %v1648, %v1647
    %v1650 = vsub.s32 4, %v1626
    %v1651 = vsel %vm1566, %v1650, %v1626
    %v1652 = vsel %vm1565, %v1042, %v1649
    %v1653 = vsel %vm1565, 0, %v1651
    %v1654 = vcosq.f32.pop %v1652
    %v1655 = vsinq.f32.pop %v1652
    %vm1656 = vweird.f32 %v1042
    %v1657 = vand.u32 %v1653, 3
    %vm1658 = vcmp.lt.s32.totalorder %v1657, 2
    %vm1659 = vcmp.eq.s32.totalorder %v1657, 0
    %v1660 = vxor.u32 %v1655, 2147483648
    %v1661 = vsel %vm1659, %v1654, %v1660
    %vm1662 = vcmp.eq.s32.totalorder %v1657, 2
    %v1663 = vxor.u32 %v1654, 2147483648
    %v1664 = vsel %vm1662, %v1663, %v1655
    %v1665 = vsel %vm1658, %v1661, %v1664
    %v1666 = vsel %vm1656, nan, %v1665
    %v1667 = vand.u32 2147483647, %v1043
    %vm1668 = vcmp.le.f32.partialorder %v1667, 0.7853982
    %vm1669 = vcmp.lt.s32.totalorder %v1043, 0
    %v1670 = vand.u32 %v1043, 2139095040
    %v1671 = vshrl.u32 %v1670, 23
    %v1672 = vsub.s32 %v1671, 127
    %v1673 = vand.u32 2147483647, %v1043
    %v1674 = vand.u32 %v1673, 8388607
    %v1675 = vor.u32 %v1674, 8388608
    %v1676 = vsub.s32 0, %v1675
    %v1677 = vadd.s32 %v1672, 1
    %vm1678 = vcmp.gt.s32.totalorder %v1677, 0
    %v1679 = vsel %vm1678, %v1677, 0
    %v1680 = vshrl.u32 %v1679, 5
    %v1681 = vand.u32 %v1679, 31
    %v1682 = vsub.s32 32, %v1681
    %v1683 = vshrl.u32 683565275, %v1682
    %v1684 = vshll.u32 683565275, %v1681
    %v1685 = vshrl.u32 2475754826, %v1682
    %v1686 = vor.u32 %v1684, %v1685
    %v1687 = vshll.u32 2475754826, %v1681
    %v1688 = vshrl.u32 2131351028, %v1682
    %v1689 = vor.u32 %v1687, %v1688
    %v1690 = vshll.u32 2131351028, %v1681
    %v1691 = vshrl.u32 2102212464, %v1682
    %v1692 = vor.u32 %v1690, %v1691
    %v1693 = vshll.u32 2102212464, %v1681
    %v1694 = vshrl.u32 920167782, %v1682
    %v1695 = vor.u32 %v1693, %v1694
    %v1696 = vshll.u32 920167782, %v1681
    %v1697 = vshrl.u32 1326507024, %v1682
    %v1698 = vor.u32 %v1696, %v1697
    %vm1699 = vcmp.lt.s32.totalorder %v1680, 1
    %vm1700 = vcmp.lt.s32.totalorder %v1680, 2
    %vm1701 = vcmp.lt.s32.totalorder %v1680, 3
    %vm1702 = vcmp.lt.s32.totalorder %v1680, 4
    %v1703 = vsel %vm1699, %v1683, %v1686
    %v1704 = vsel %vm1702, %v1692, 2102212464
    %v1705 = vsel %vm1701, %v1689, %v1704
    %v1706 = vsel %vm1700, %v1703, %v1705
    %v1707 = vsel %vm1699, %v1686, %v1689
    %v1708 = vsel %vm1702, %v1695, 920167782
    %v1709 = vsel %vm1701, %v1692, %v1708
    %v1710 = vsel %vm1700, %v1707, %v1709
    %v1711 = vsel %vm1699, %v1689, %v1692
    %v1712 = vsel %vm1702, %v1698, 1326507024
    %v1713 = vsel %vm1701, %v1695, %v1712
    %v1714 = vsel %vm1700, %v1711, %v1713
    %v1715 = vshll.u32 %v1675, 8
    %v1716 = vmul.u32.u64.compose %v1715, %v1714
    %v1717 = vextract.low.u32 %v1716
    %v1718 = vextract.high.u32 %v1716
    %v1719 = vmul.u32.u64.compose %v1715, %v1710
    %v1720 = vextract.low.u32 %v1719
    %v1721 = vextract.high.u32 %v1719
    %v1722 = vmul.u32 %v1715, %v1706
    %v1723 = vadd.s32 %v1718, %v1720
    %vm1724 = vc.u32 %v1718, %v1720
    %v1725 = vadd.s32 %v1721, 1
    %v1726 = vsel %vm1724, %v1725, %v1721
    %v1727 = vadd.s32 %v1722, %v1726
    %v1728 = vadd.s32 %v1727, 536870912
    %v1729 = vshrl.u32 %v1728, 30
    %v1730 = vshll.u32 %v1729, 30
    %v1731 = vsub.s32 %v1727, %v1730
    %vm1732 = vcmp.lt.s32.totalorder %v1731, 0
    %v1733 = vsub.s32 0, %v1731
    %v1734 = vsel %vm1732, %v1733, %v1731
    %v1735 = vclz %v1734
    %v1736 = vsub.s32 %v1735, 2
    %vm1737 = vcmp.gt.s32.totalorder 0, %v1736
    %v1738 = vsel %vm1737, 0, %v1736
    %v1739 = vsub.s32 32, %v1738
    %v1740 = vshll.u32 %v1731, %v1738
    %v1741 = vshrl.u32 %v1723, %v1739
    %v1742 = vor.u32 %v1740, %v1741
    %v1743 = vsub.s32 4294967266, %v1738
    %v1744 = vadd.s32 %v1743, 127
    %v1745 = vshll.u32 %v1744, 23
    %v1746 = vor.u32 4788187, %v1745
    %v1747 = vand.u32 2147483647, %v1746
    %v1749 = vcvt.s32.f32 %v1742
    %v1750 = vmul.f32 %v1749, %v1747
    %v1751 = vxor.u32 %v1750, 2147483648
    %v1752 = vsel %vm1669, %v1751, %v1750
    %v1753 = vsub.s32 4, %v1729
    %v1754 = vsel %vm1669, %v1753, %v1729
    %v1755 = vsel %vm1668, %v1043, %v1752
    %v1756 = vsel %vm1668, 0, %v1754
    %v1757 = vcosq.f32.pop %v1755
    %v1758 = vsinq.f32.pop %v1755
    %vm1759 = vweird.f32 %v1043
    %v1760 = vand.u32 %v1756, 3
    %vm1761 = vcmp.lt.s32.totalorder %v1760, 2
    %vm1762 = vcmp.eq.s32.totalorder %v1760, 0
    %v1763 = vxor.u32 %v1758, 2147483648
    %v1764 = vsel %vm1762, %v1757, %v1763
    %vm1765 = vcmp.eq.s32.totalorder %v1760, 2
    %v1766 = vxor.u32 %v1757, 2147483648
    %v1767 = vsel %vm1765, %v1766, %v1758
    %v1768 = vsel %vm1761, %v1764, %v1767
    %v1769 = vsel %vm1759, nan, %v1768
    %v1770 = vand.u32 2147483647, %v1044
    %vm1771 = vcmp.le.f32.partialorder %v1770, 0.7853982
    %vm1772 = vcmp.lt.s32.totalorder %v1044, 0
    %v1773 = vand.u32 %v1044, 2139095040
    %v1774 = vshrl.u32 %v1773, 23
    %v1775 = vsub.s32 %v1774, 127
    %v1776 = vand.u32 2147483647, %v1044
    %v1777 = vand.u32 %v1776, 8388607
    %v1778 = vor.u32 %v1777, 8388608
    %v1779 = vsub.s32 0, %v1778
    %v1780 = vadd.s32 %v1775, 1
    %vm1781 = vcmp.gt.s32.totalorder %v1780, 0
    %v1782 = vsel %vm1781, %v1780, 0
    %v1783 = vshrl.u32 %v1782, 5
    %v1784 = vand.u32 %v1782, 31
    %v1785 = vsub.s32 32, %v1784
    %v1786 = vshrl.u32 683565275, %v1785
    %v1787 = vshll.u32 683565275, %v1784
    %v1788 = vshrl.u32 2475754826, %v1785
    %v1789 = vor.u32 %v1787, %v1788
    %v1790 = vshll.u32 2475754826, %v1784
    %v1791 = vshrl.u32 2131351028, %v1785
    %v1792 = vor.u32 %v1790, %v1791
    %v1793 = vshll.u32 2131351028, %v1784
    %v1794 = vshrl.u32 2102212464, %v1785
    %v1795 = vor.u32 %v1793, %v1794
    %v1796 = vshll.u32 2102212464, %v1784
    %v1797 = vshrl.u32 920167782, %v1785
    %v1798 = vor.u32 %v1796, %v1797
    %v1799 = vshll.u32 920167782, %v1784
    %v1800 = vshrl.u32 1326507024, %v1785
    %v1801 = vor.u32 %v1799, %v1800
    %vm1802 = vcmp.lt.s32.totalorder %v1783, 1
    %vm1803 = vcmp.lt.s32.totalorder %v1783, 2
    %vm1804 = vcmp.lt.s32.totalorder %v1783, 3
    %vm1805 = vcmp.lt.s32.totalorder %v1783, 4
    %v1806 = vsel %vm1802, %v1786, %v1789
    %v1807 = vsel %vm1805, %v1795, 2102212464
    %v1808 = vsel %vm1804, %v1792, %v1807
    %v1809 = vsel %vm1803, %v1806, %v1808
    %v1810 = vsel %vm1802, %v1789, %v1792
    %v1811 = vsel %vm1805, %v1798, 920167782
    %v1812 = vsel %vm1804, %v1795, %v1811
    %v1813 = vsel %vm1803, %v1810, %v1812
    %v1814 = vsel %vm1802, %v1792, %v1795
    %v1815 = vsel %vm1805, %v1801, 1326507024
    %v1816 = vsel %vm1804, %v1798, %v1815
    %v1817 = vsel %vm1803, %v1814, %v1816
    %v1818 = vshll.u32 %v1778, 8
    %v1819 = vmul.u32.u64.compose %v1818, %v1817
    %v1820 = vextract.low.u32 %v1819
    %v1821 = vextract.high.u32 %v1819
    %v1822 = vmul.u32.u64.compose %v1818, %v1813
    %v1823 = vextract.low.u32 %v1822
    %v1824 = vextract.high.u32 %v1822
    %v1825 = vmul.u32 %v1818, %v1809
    %v1826 = vadd.s32 %v1821, %v1823
    %vm1827 = vc.u32 %v1821, %v1823
    %v1828 = vadd.s32 %v1824, 1
    %v1829 = vsel %vm1827, %v1828, %v1824
    %v1830 = vadd.s32 %v1825, %v1829
    %v1831 = vadd.s32 %v1830, 536870912
    %v1832 = vshrl.u32 %v1831, 30
    %v1833 = vshll.u32 %v1832, 30
    %v1834 = vsub.s32 %v1830, %v1833
    %vm1835 = vcmp.lt.s32.totalorder %v1834, 0
    %v1836 = vsub.s32 0, %v1834
    %v1837 = vsel %vm1835, %v1836, %v1834
    %v1838 = vclz %v1837
    %v1839 = vsub.s32 %v1838, 2
    %vm1840 = vcmp.gt.s32.totalorder 0, %v1839
    %v1841 = vsel %vm1840, 0, %v1839
    %v1842 = vsub.s32 32, %v1841
    %v1843 = vshll.u32 %v1834, %v1841
    %v1844 = vshrl.u32 %v1826, %v1842
    %v1845 = vor.u32 %v1843, %v1844
    %v1846 = vsub.s32 4294967266, %v1841
    %v1847 = vadd.s32 %v1846, 127
    %v1848 = vshll.u32 %v1847, 23
    %v1849 = vor.u32 4788187, %v1848
    %v1850 = vand.u32 2147483647, %v1849
    %v1852 = vcvt.s32.f32 %v1845
    %v1853 = vmul.f32 %v1852, %v1850
    %v1854 = vxor.u32 %v1853, 2147483648
    %v1855 = vsel %vm1772, %v1854, %v1853
    %v1856 = vsub.s32 4, %v1832
    %v1857 = vsel %vm1772, %v1856, %v1832
    %v1858 = vsel %vm1771, %v1044, %v1855
    %v1859 = vsel %vm1771, 0, %v1857
    %v1860 = vcosq.f32.pop %v1858
    %v1861 = vsinq.f32.pop %v1858
    %vm1862 = vweird.f32 %v1044
    %v1863 = vand.u32 %v1859, 3
    %vm1864 = vcmp.lt.s32.totalorder %v1863, 2
    %vm1865 = vcmp.eq.s32.totalorder %v1863, 0
    %v1866 = vxor.u32 %v1861, 2147483648
    %v1867 = vsel %vm1865, %v1860, %v1866
    %vm1868 = vcmp.eq.s32.totalorder %v1863, 2
    %v1869 = vxor.u32 %v1860, 2147483648
    %v1870 = vsel %vm1868, %v1869, %v1861
    %v1871 = vsel %vm1864, %v1867, %v1870
    %v1872 = vsel %vm1862, nan, %v1871
    %1873 = vxpose.xlu0.b32.start [1/16] %v282, 128
    %1874 = vxpose.xlu0.b32.cont [2/16] %v386, 128
    %1875 = vxpose.xlu0.b32.cont [3/16] %v490, 128
    %1876 = vxpose.xlu0.b32.cont [4/16] %v594, 128
    %1877 = vxpose.xlu0.b32.cont [5/16] %v697, 128
    %1878 = vxpose.xlu0.b32.cont [6/16] %v800, 128
    %1879 = vxpose.xlu0.b32.cont [7/16] %v903, 128
    %1880 = vxpose.xlu0.b32.cont [8/16] %v1006, 128
    %1881 = vxpose.xlu0.b32.cont [9/16] %v1148, 128
    %1882 = vxpose.xlu0.b32.cont [10/16] %v1252, 128
    %1883 = vxpose.xlu0.b32.cont [11/16] %v1356, 128
    %1884 = vxpose.xlu0.b32.cont [12/16] %v1460, 128
    %1885 = vxpose.xlu0.b32.cont [13/16] %v1563, 128
    %1886 = vxpose.xlu0.b32.cont [14/16] %v1666, 128
    %1887 = vxpose.xlu0.b32.cont [15/16] %v1769, 128
    %1888 = vxpose.xlu0.b32.end [16/16] %v1872, 128
    %v1889 = vpop.trf.xlu0
    %v1890 = vpop.trf.xlu0
    %v1891 = vpop.trf.xlu0
    %v1892 = vpop.trf.xlu0
    %v1893 = vpop.trf.xlu0
    %v1894 = vpop.trf.xlu0
    %v1895 = vpop.trf.xlu0
    %v1896 = vpop.trf.xlu0
    %v1897 = vpop.trf.xlu0
    %v1898 = vpop.trf.xlu0
    %v1899 = vpop.trf.xlu0
    %v1900 = vpop.trf.xlu0
    %v1901 = vpop.trf.xlu0
    %v1902 = vpop.trf.xlu0
    %v1903 = vpop.trf.xlu0
    %v1904 = vpop.trf.xlu0
    %1921 = vrot.lane.b32.xlu0 %v1889, 126
    %v1922 = vpop.permute.xlu0 %1921
    %1923 = vrot.lane.b32.xlu0 %v1890, 126
    %v1924 = vpop.permute.xlu0 %1923
    %1925 = vrot.lane.b32.xlu0 %v1891, 126
    %v1926 = vpop.permute.xlu0 %1925
    %1927 = vrot.lane.b32.xlu0 %v1892, 126
    %v1928 = vpop.permute.xlu0 %1927
    %1929 = vrot.lane.b32.xlu0 %v1893, 126
    %v1930 = vpop.permute.xlu0 %1929
    %1931 = vrot.lane.b32.xlu0 %v1894, 126
    %v1932 = vpop.permute.xlu0 %1931
    %1933 = vrot.lane.b32.xlu0 %v1895, 126
    %v1934 = vpop.permute.xlu0 %1933
    %1935 = vrot.lane.b32.xlu0 %v1896, 126
    %v1936 = vpop.permute.xlu0 %1935
    %1937 = vrot.lane.b32.xlu0 %v1897, 126
    %v1938 = vpop.permute.xlu0 %1937
    %1939 = vrot.lane.b32.xlu0 %v1898, 126
    %v1940 = vpop.permute.xlu0 %1939
    %1941 = vrot.lane.b32.xlu0 %v1899, 126
    %v1942 = vpop.permute.xlu0 %1941
    %1943 = vrot.lane.b32.xlu0 %v1900, 126
    %v1944 = vpop.permute.xlu0 %1943
    %1945 = vrot.lane.b32.xlu0 %v1901, 126
    %v1946 = vpop.permute.xlu0 %1945
    %1947 = vrot.lane.b32.xlu0 %v1902, 126
    %v1948 = vpop.permute.xlu0 %1947
    %1949 = vrot.lane.b32.xlu0 %v1903, 126
    %v1950 = vpop.permute.xlu0 %1949
    %1951 = vrot.lane.b32.xlu0 %v1904, 126
    %v1952 = vpop.permute.xlu0 %1951
    %vm1969 = vcmask 244736
    %v1970 = vsel %vm1969, %v1889, %v1922
    %v1971 = vsel %vm1969, %v1890, %v1924
    %v1972 = vsel %vm1969, %v1891, %v1926
    %v1973 = vsel %vm1969, %v1892, %v1928
    %v1974 = vsel %vm1969, %v1893, %v1930
    %v1975 = vsel %vm1969, %v1894, %v1932
    %v1976 = vsel %vm1969, %v1895, %v1934
    %v1977 = vsel %vm1969, %v1896, %v1936
    %v1978 = vsel %vm1969, %v1897, %v1938
    %v1979 = vsel %vm1969, %v1898, %v1940
    %v1980 = vsel %vm1969, %v1899, %v1942
    %v1981 = vsel %vm1969, %v1900, %v1944
    %v1982 = vsel %vm1969, %v1901, %v1946
    %v1983 = vsel %vm1969, %v1902, %v1948
    %v1984 = vsel %vm1969, %v1903, %v1950
    %v1985 = vsel %vm1969, %v1904, %v1952
    %vm1986 = vcmask 490496
    %1987 = vst.msk [vmem:[#allocation5] sm:$0xff] %vm1986, %v1970
    %1988 = vst.msk [vmem:[#allocation5 + $0x8] sm:$0xff] %vm1986, %v1971
    %1989 = vst.msk [vmem:[#allocation5 + $0x10] sm:$0xff] %vm1986, %v1972
    %1990 = vst.msk [vmem:[#allocation5 + $0x18] sm:$0xff] %vm1986, %v1973
    %1991 = vst.msk [vmem:[#allocation5 + $0x20] sm:$0xff] %vm1986, %v1974
    %1992 = vst.msk [vmem:[#allocation5 + $0x28] sm:$0xff] %vm1986, %v1975
    %1993 = vst.msk [vmem:[#allocation5 + $0x30] sm:$0xff] %vm1986, %v1976
    %1994 = vst.msk [vmem:[#allocation5 + $0x38] sm:$0xff] %vm1986, %v1977
    %1995 = vst.msk [vmem:[#allocation5 + $0x40] sm:$0xff] %vm1986, %v1978
    %1996 = vst.msk [vmem:[#allocation5 + $0x48] sm:$0xff] %vm1986, %v1979
    %1997 = vst.msk [vmem:[#allocation5 + $0x50] sm:$0xff] %vm1986, %v1980
    %1998 = vst.msk [vmem:[#allocation5 + $0x58] sm:$0xff] %vm1986, %v1981
    %1999 = vst.msk [vmem:[#allocation5 + $0x60] sm:$0xff] %vm1986, %v1982
    %2000 = vst.msk [vmem:[#allocation5 + $0x68] sm:$0xff] %vm1986, %v1983
    %2001 = vst.msk [vmem:[#allocation5 + $0x70] sm:$0xff] %vm1986, %v1984
    %2002 = vst.msk [vmem:[#allocation5 + $0x78] sm:$0xff] %vm1986, %v1985
    %2003 = vrot.lane.b32.xlu0 %v1889, 64
    %v2004 = vpop.permute.xlu0 %2003
    %2005 = vrot.lane.b32.xlu0 %v1890, 64
    %v2006 = vpop.permute.xlu0 %2005
    %2007 = vrot.lane.b32.xlu0 %v1891, 64
    %v2008 = vpop.permute.xlu0 %2007
    %2009 = vrot.lane.b32.xlu0 %v1892, 64
    %v2010 = vpop.permute.xlu0 %2009
    %2011 = vrot.lane.b32.xlu0 %v1893, 64
    %v2012 = vpop.permute.xlu0 %2011
    %2013 = vrot.lane.b32.xlu0 %v1894, 64
    %v2014 = vpop.permute.xlu0 %2013
    %2015 = vrot.lane.b32.xlu0 %v1895, 64
    %v2016 = vpop.permute.xlu0 %2015
    %2017 = vrot.lane.b32.xlu0 %v1896, 64
    %v2018 = vpop.permute.xlu0 %2017
    %2019 = vrot.lane.b32.xlu0 %v1897, 64
    %v2020 = vpop.permute.xlu0 %2019
    %2021 = vrot.lane.b32.xlu0 %v1898, 64
    %v2022 = vpop.permute.xlu0 %2021
    %2023 = vrot.lane.b32.xlu0 %v1899, 64
    %v2024 = vpop.permute.xlu0 %2023
    %2025 = vrot.lane.b32.xlu0 %v1900, 64
    %v2026 = vpop.permute.xlu0 %2025
    %2027 = vrot.lane.b32.xlu0 %v1901, 64
    %v2028 = vpop.permute.xlu0 %2027
    %2029 = vrot.lane.b32.xlu0 %v1902, 64
    %v2030 = vpop.permute.xlu0 %2029
    %2031 = vrot.lane.b32.xlu0 %v1903, 64
    %v2032 = vpop.permute.xlu0 %2031
    %2033 = vrot.lane.b32.xlu0 %v1904, 64
    %v2034 = vpop.permute.xlu0 %2033
    %2051 = vrot.lane.b32.xlu0 %v1889, 62
    %v2052 = vpop.permute.xlu0 %2051
    %2053 = vrot.lane.b32.xlu0 %v1890, 62
    %v2054 = vpop.permute.xlu0 %2053
    %2055 = vrot.lane.b32.xlu0 %v1891, 62
    %v2056 = vpop.permute.xlu0 %2055
    %2057 = vrot.lane.b32.xlu0 %v1892, 62
    %v2058 = vpop.permute.xlu0 %2057
    %2059 = vrot.lane.b32.xlu0 %v1893, 62
    %v2060 = vpop.permute.xlu0 %2059
    %2061 = vrot.lane.b32.xlu0 %v1894, 62
    %v2062 = vpop.permute.xlu0 %2061
    %2063 = vrot.lane.b32.xlu0 %v1895, 62
    %v2064 = vpop.permute.xlu0 %2063
    %2065 = vrot.lane.b32.xlu0 %v1896, 62
    %v2066 = vpop.permute.xlu0 %2065
    %2067 = vrot.lane.b32.xlu0 %v1897, 62
    %v2068 = vpop.permute.xlu0 %2067
    %2069 = vrot.lane.b32.xlu0 %v1898, 62
    %v2070 = vpop.permute.xlu0 %2069
    %2071 = vrot.lane.b32.xlu0 %v1899, 62
    %v2072 = vpop.permute.xlu0 %2071
    %2073 = vrot.lane.b32.xlu0 %v1900, 62
    %v2074 = vpop.permute.xlu0 %2073
    %2075 = vrot.lane.b32.xlu0 %v1901, 62
    %v2076 = vpop.permute.xlu0 %2075
    %2077 = vrot.lane.b32.xlu0 %v1902, 62
    %v2078 = vpop.permute.xlu0 %2077
    %2079 = vrot.lane.b32.xlu0 %v1903, 62
    %v2080 = vpop.permute.xlu0 %2079
    %2081 = vrot.lane.b32.xlu0 %v1904, 62
    %v2082 = vpop.permute.xlu0 %2081
    %v2099 = vsel %vm1969, %v2004, %v2052
    %v2100 = vsel %vm1969, %v2006, %v2054
    %v2101 = vsel %vm1969, %v2008, %v2056
    %v2102 = vsel %vm1969, %v2010, %v2058
    %v2103 = vsel %vm1969, %v2012, %v2060
    %v2104 = vsel %vm1969, %v2014, %v2062
    %v2105 = vsel %vm1969, %v2016, %v2064
    %v2106 = vsel %vm1969, %v2018, %v2066
    %v2107 = vsel %vm1969, %v2020, %v2068
    %v2108 = vsel %vm1969, %v2022, %v2070
    %v2109 = vsel %vm1969, %v2024, %v2072
    %v2110 = vsel %vm1969, %v2026, %v2074
    %v2111 = vsel %vm1969, %v2028, %v2076
    %v2112 = vsel %vm1969, %v2030, %v2078
    %v2113 = vsel %vm1969, %v2032, %v2080
    %v2114 = vsel %vm1969, %v2034, %v2082
    %s2115 = scalar_lea.vmem [#allocation5], %s1007
    %2116 = vst.msk [vmem:[%s2115] sm:$0xff] %vm1986, %v2099
    %2117 = vst.msk [vmem:[%s2115 + $0x8] sm:$0xff] %vm1986, %v2100
    %2118 = vst.msk [vmem:[%s2115 + $0x10] sm:$0xff] %vm1986, %v2101
    %2119 = vst.msk [vmem:[%s2115 + $0x18] sm:$0xff] %vm1986, %v2102
    %2120 = vst.msk [vmem:[%s2115 + $0x20] sm:$0xff] %vm1986, %v2103
    %2121 = vst.msk [vmem:[%s2115 + $0x28] sm:$0xff] %vm1986, %v2104
    %2122 = vst.msk [vmem:[%s2115 + $0x30] sm:$0xff] %vm1986, %v2105
    %2123 = vst.msk [vmem:[%s2115 + $0x38] sm:$0xff] %vm1986, %v2106
    %2124 = vst.msk [vmem:[%s2115 + $0x40] sm:$0xff] %vm1986, %v2107
    %2125 = vst.msk [vmem:[%s2115 + $0x48] sm:$0xff] %vm1986, %v2108
    %2126 = vst.msk [vmem:[%s2115 + $0x50] sm:$0xff] %vm1986, %v2109
    %2127 = vst.msk [vmem:[%s2115 + $0x58] sm:$0xff] %vm1986, %v2110
    %2128 = vst.msk [vmem:[%s2115 + $0x60] sm:$0xff] %vm1986, %v2111
    %2129 = vst.msk [vmem:[%s2115 + $0x68] sm:$0xff] %vm1986, %v2112
    %2130 = vst.msk [vmem:[%s2115 + $0x70] sm:$0xff] %vm1986, %v2113
    %2131 = vst.msk [vmem:[%s2115 + $0x78] sm:$0xff] %vm1986, %v2114
    // Predicated region
    $region10: #{tpu_custom_call.1} parent=1 // pred_check
      _
    $region11: #{tpu_custom_call.1} parent=1 // pred_check_branch
      %2133 = sbr.rel (0) target = $region13
    $region12: #{tpu_custom_call.1} parent=1 // pred_region
      %s2135 = ssub.s32 4096, 256
      %2136 = vsyncadd [#allocation4], %s2135
      %s2137 = sshll.u32 [#allocation5], 4
      %s2138 = int_to_ptr.vmem [resolvable:$true] %s2137
      %2143 = dma.vmem_to_hbm [thread:$0]  %s2138, 256, %s1, [#allocation4], 128, 128, 8
    $region13: #{tpu_custom_call.1} parent=1 // pred_fallthru
      _
    // Predicated region
    $region14: #{tpu_custom_call.1} parent=1 // pred_check
      _
    $region15: #{tpu_custom_call.1} parent=1 // pred_check_branch
      %2145 = sbr.rel (0) target = $region17
    $region16: #{tpu_custom_call.1} parent=1 // pred_region
      %2146 = dma.done [#allocation4], 4096
    $region17: #{tpu_custom_call.1} parent=1 // pred_fallthru
      _
    %2147 = vsyncpa [#allocation3], 1
    %2148 = vsyncpa [#allocation4], 1

</llo_original>
